<compile_context>
chip_gen: v7x
topology: tpu7x:2x2x1
jax: 0.10.0
libtpu: 0.0.40
codegen_flags: <defaults>
</compile_context>

<pallas_src>
from functools import partial

import jax
import jax.numpy as jnp
from jax import lax
from jax.experimental import pallas as pl
from jax.experimental.pallas import tpu as pltpu


# ----------------------------------------------------------------------------
# generation-aware budgets
# ----------------------------------------------------------------------------
def _tpu_vmem_phys_bytes():
    try:
        info = pltpu.get_tpu_info()
        for attr in ("vmem_capacity_bytes", "vmem_bytes", "vmem_size_bytes"):
            v = getattr(info, attr, None)
            if v:
                return int(v)
    except Exception:
        pass
    return None


_VMEM_PHYS = _tpu_vmem_phys_bytes() or (64 * 1024 * 1024)       # conservative fallback
# ~85% of physical, capped: ≈54 MiB on v7x (64 MiB phys), ≈109 MiB on v5e/v6e (128 MiB).
VMEM_LIMIT_BYTES = min(int(_VMEM_PHYS * 0.85), 112 * 1024 * 1024)
# Bigger row tiles amortize per-step pipeline overhead; 1024 only where VMEM allows.
ROW_TILE_MAX = 1024 if _VMEM_PHYS >= 128 * 1024 * 1024 else 512

# Approximate EUP reciprocal for the softmax denominator (~1e-3 rel. err, fine for bf16
# outputs).  Set False for strict parity with the PyTorch softmax.
APPROX_SOFTMAX_RECIPROCAL = True

# v7x option: single-buffer the grid-invariant weight blocks to halve their resident
# VMEM (matters for CLIP-giant D=1664).  Off by default for maximum compatibility.
SINGLE_BUFFER_WEIGHTS = False


# ----------------------------------------------------------------------------
# tiling helpers
# ----------------------------------------------------------------------------
def _row_tile(n_rows):
    """Fixed large row tile; partial last block is handled by Pallas OOB masking."""
    return n_rows if n_rows <= ROW_TILE_MAX else ROW_TILE_MAX


def _heads_per_block(num_heads, head_dim):
    """Smallest head group whose column width is lane-aligned (multiple of 128);
    falls back to all heads (block width == D, the full last dim)."""
    for g in range(1, num_heads + 1):
        if num_heads % g == 0 and (g * head_dim) % 128 == 0:
            return g
    return num_heads


def _const_spec(a):
    """Grid-invariant (weight / bias) block: whole array, constant index map."""
    nd = a.ndim
    if SINGLE_BUFFER_WEIGHTS:
        return pl.BlockSpec(a.shape, lambda i, _nd=nd: (0,) * _nd,
                            pipeline_mode=pl.Buffered(1))
    return pl.BlockSpec(a.shape, lambda i, _nd=nd: (0,) * _nd)


# ----------------------------------------------------------------------------
# kernels
# ----------------------------------------------------------------------------
def qkv_proj_kernel(x_ref, wq_ref, bq_ref, wk_ref, bk_ref, wv_ref, bv_ref,
                    q_ref, k_ref, v_ref):
    # bf16 MXU inputs, f32 accumulation; 1/sqrt(hd) pre-folded into wq/bq.
    x = x_ref[...].astype(jnp.bfloat16)
    q = jnp.dot(x, wq_ref[...], preferred_element_type=jnp.float32) + bq_ref[...]
    k = jnp.dot(x, wk_ref[...], preferred_element_type=jnp.float32) + bk_ref[...]
    v = jnp.dot(x, wv_ref[...], preferred_element_type=jnp.float32) + bv_ref[...]
    q_ref[...] = q.astype(q_ref.dtype)
    k_ref[...] = k.astype(k_ref.dtype)
    v_ref[...] = v.astype(v_ref.dtype)


def attention_core_kernel(q_ref, k_ref, v_ref, o_ref, *,
                          heads_per_block, head_dim, approx_recip):
    # One (batch, head-group) step.  Blocks are lane-dense (>=128-wide or full-D)
    # column slabs of the (B, S, D) activations; heads are split with static VMEM
    # slices — no XLA transposes, no lane-sparse HBM I/O, 2-D MXU matmuls only.
    q = q_ref[0]                                   # (S, Wg) bf16
    k = k_ref[0]
    v = v_ref[0]
    for h in range(heads_per_block):               # static unroll (small group)
        lo = h * head_dim
        hi = lo + head_dim
        qh = q[:, lo:hi]                           # (S, hd)
        kh = k[:, lo:hi]
        vh = v[:, lo:hi]
        # s = q @ k^T, f32 accumulate (contraction on the shared minor dim).
        s = lax.dot_general(qh, kh, (((1,), (1,)), ((), ())),
                            preferred_element_type=jnp.float32)   # (S, S) f32
        m = jnp.max(s, axis=-1, keepdims=True)
        e = jnp.exp(s - m)
        denom = jnp.sum(e, axis=-1, keepdims=True)                # (S, 1) f32
        # PV matmul on the UNnormalized exp; normalize the (S, hd) context afterwards
        # (S*hd multiplies instead of S*S), reciprocal on the EUP.
        ctx = jnp.dot(e.astype(vh.dtype), vh,
                      preferred_element_type=jnp.float32)          # (S, hd) f32
        ctx = ctx * pl.reciprocal(denom, approx=approx_recip)
        o_ref[0, :, lo:hi] = ctx.astype(o_ref.dtype)


def linear_kernel(x_ref, w_ref, b_ref, o_ref):
    x = x_ref[...].astype(jnp.bfloat16)
    y = jnp.dot(x, w_ref[...], preferred_element_type=jnp.float32) + b_ref[...]
    o_ref[...] = y.astype(o_ref.dtype)


# ----------------------------------------------------------------------------
# pallas_call wrappers
# ----------------------------------------------------------------------------
def pallas_qkv_proj(x2d, wq, bq, wk, bk, wv, bv, out_dtype=jnp.bfloat16):
    M, Din = x2d.shape
    D = wq.shape[1]
    tm = _row_tile(M)
    grid = (pl.cdiv(M, tm),)                      # partial last block masked by Pallas
    row_in = pl.BlockSpec((tm, Din), lambda i: (i, 0))
    row_out = pl.BlockSpec((tm, D), lambda i: (i, 0))
    out_sds = jax.ShapeDtypeStruct((M, D), out_dtype)
    return pl.pallas_call(
        qkv_proj_kernel,
        grid=grid,
        in_specs=[row_in] + [_const_spec(a) for a in (wq, bq, wk, bk, wv, bv)],
        out_specs=(row_out, row_out, row_out),
        out_shape=(out_sds, out_sds, out_sds),
        compiler_params=pltpu.CompilerParams(
            dimension_semantics=("parallel",),
            vmem_limit_bytes=VMEM_LIMIT_BYTES),
    )(x2d, wq, bq, wk, bk, wv, bv)


def pallas_attention_core(q, k, v, num_heads, out_dtype=jnp.bfloat16):
    # q/k/v: (B, S, D) — same layout as the projection outputs (no transposes).
    B, S, D = q.shape
    hd = D // num_heads
    g = _heads_per_block(num_heads, hd)
    wg = g * hd
    grid = (B, num_heads // g)
    spec = pl.BlockSpec((1, S, wg), lambda b, j: (b, 0, j))
    kern = partial(attention_core_kernel, heads_per_block=g, head_dim=hd,
                   approx_recip=APPROX_SOFTMAX_RECIPROCAL)
    # TODO(synk): for very long sequences (S >> 1024), also tile the query dim to bound
    #             the (S, S) f32 score temporaries.
    return pl.pallas_call(
        kern,
        grid=grid,
        in_specs=[spec, spec, spec],
        out_specs=spec,
        out_shape=jax.ShapeDtypeStruct((B, S, D), out_dtype),
        compiler_params=pltpu.CompilerParams(
            dimension_semantics=("parallel", "parallel"),
            vmem_limit_bytes=VMEM_LIMIT_BYTES),
    )(q, k, v)


def pallas_linear(x2d, w, b, out_dtype):
    M, Din = x2d.shape
    N = w.shape[1]
    tm = _row_tile(M)
    grid = (pl.cdiv(M, tm),)
    return pl.pallas_call(
        linear_kernel,
        grid=grid,
        in_specs=[pl.BlockSpec((tm, Din), lambda i: (i, 0)),
                  _const_spec(w), _const_spec(b)],
        out_specs=pl.BlockSpec((tm, N), lambda i: (i, 0)),
        out_shape=jax.ShapeDtypeStruct((M, N), out_dtype),
        compiler_params=pltpu.CompilerParams(
            dimension_semantics=("parallel",),
            vmem_limit_bytes=VMEM_LIMIT_BYTES),
    )(x2d, w, b)


# ----------------------------------------------------------------------------
# CLIPAttention forward (eval mode, no masks)
# ----------------------------------------------------------------------------
def clip_attention_forward(kparams, hidden_states, num_heads,
                           attention_mask=None, causal_attention_mask=None,
                           output_attentions=False):
    assert attention_mask is None and causal_attention_mask is None, (
        "attention_mask / causal_attention_mask are not implemented "
        "(always None for CLIP-ViT)")
    assert not output_attentions, "output_attentions=True is not implemented"
    # TODO(synk): dropout is an eval-mode no-op and is not implemented in-kernel.

    B, S, D = hidden_states.shape

    x2d = hidden_states.reshape(B * S, D)
    q2d, k2d, v2d = pallas_qkv_proj(
        x2d, kparams["wq"], kparams["bq"], kparams["wk"], kparams["bk"],
        kparams["wv"], kparams["bv"], out_dtype=jnp.bfloat16)

    # Free reshapes only — head split/merge happens inside the attention BlockSpecs.
    ctx = pallas_attention_core(q2d.reshape(B, S, D),
                                k2d.reshape(B, S, D),
                                v2d.reshape(B, S, D),
                                num_heads, out_dtype=jnp.bfloat16)

    out2d = pallas_linear(ctx.reshape(B * S, D), kparams["wo"], kparams["bo"],
                          out_dtype=hidden_states.dtype)
    # matches the PyTorch return signature: (attn_output, attn_weights=None)
    return out2d.reshape(B, S, D), None


# ----------------------------------------------------------------------------
# parameters (PyTorch nn.Linear layout) + prep into kernel layout
# ----------------------------------------------------------------------------
def init_torch_params(key, embed_dim):
    ks = jax.random.split(key, 8)

    def w(k):
        return jax.random.normal(k, (embed_dim, embed_dim), jnp.float32) * 0.02

    def b(k):
        return jax.random.normal(k, (embed_dim,), jnp.float32) * 0.02

    return dict(q_w=w(ks[0]), q_b=b(ks[1]),
                k_w=w(ks[2]), k_b=b(ks[3]),
                v_w=w(ks[4]), v_b=b(ks[5]),
                o_w=w(ks[6]), o_b=b(ks[7]))


def prep_kernel_params(tp, num_heads):
    D = tp["q_w"].shape[0]
    hd = D // num_heads
    scale = hd ** -0.5
    return dict(
        # scale folded into the q projection; weights pre-transposed to (in, out) bf16
        wq=(tp["q_w"] * scale).T.astype(jnp.bfloat16),
        bq=(tp["q_b"] * scale).reshape(1, D).astype(jnp.float32),
        wk=tp["k_w"].T.astype(jnp.bfloat16),
        bk=tp["k_b"].reshape(1, D).astype(jnp.float32),
        wv=tp["v_w"].T.astype(jnp.bfloat16),
        bv=tp["v_b"].reshape(1, D).astype(jnp.float32),
        wo=tp["o_w"].T.astype(jnp.bfloat16),
        bo=tp["o_b"].reshape(1, D).astype(jnp.float32),
    )


def clip_attention_reference(tp, hidden_states, num_heads):
    """Pure-JAX f32 reference matching the PyTorch module math."""
    B, S, D = hidden_states.shape
    hd = D // num_heads
    scale = hd ** -0.5
    q = (hidden_states @ tp["q_w"].T + tp["q_b"]) * scale
    k = hidden_states @ tp["k_w"].T + tp["k_b"]
    v = hidden_states @ tp["v_w"].T + tp["v_b"]

    def sh(t):
        return t.reshape(B, S, num_heads, hd).transpose(0, 2, 1, 3)

    q, k, v = sh(q), sh(k), sh(v)
    s = jnp.einsum('bhqe,bhke->bhqk', q, k)
    p = jax.nn.softmax(s, axis=-1)
    ctx = jnp.einsum('bhqk,bhke->bhqe', p, v)
    ctx = ctx.transpose(0, 2, 1, 3).reshape(B, S, D)
    return ctx @ tp["o_w"].T + tp["o_b"]


# ----------------------------------------------------------------------------
# main
# ----------------------------------------------------------------------------
if __name__ == "__main__":
    B, S, D, H = 2, 8, 32, 4

    key = jax.random.PRNGKey(0)
    pkey, xkey = jax.random.split(key)
    torch_params = init_torch_params(pkey, D)
    kparams = prep_kernel_params(torch_params, H)
    hidden_states = jax.random.normal(xkey, (B, S, D), jnp.float32)

    fwd = jax.jit(partial(clip_attention_forward, num_heads=H))
    attn_out, attn_weights = fwd(kparams, hidden_states)
    jax.block_until_ready(attn_out)

    assert attn_out.shape == (B, S, D)
    assert attn_weights is None

    ref = clip_attention_reference(torch_params, hidden_states, H)
    max_err = float(jnp.max(jnp.abs(attn_out - ref)))
    assert max_err < 5e-2, f"max abs error {max_err}"

    print("KERNEL_OK")
</pallas_src>

<mosaic_0001>
module attributes {stable_mosaic.version = 11 : i64} {
  func.func @linear_kernel(%arg0: i32, %arg1: memref<16x32xbf16, #tpu.memory_space<vmem>>, %arg2: memref<32x32xbf16, #tpu.memory_space<vmem>>, %arg3: memref<1x32xf32, #tpu.memory_space<vmem>>, %arg4: memref<16x32xf32, #tpu.memory_space<vmem>>) attributes {dimension_semantics = [#tpu.dimension_semantics<parallel>], iteration_bounds = array<i64: 1>, scalar_prefetch = 0 : i64, scratch_operands = 0 : i64, tpu.core_type = #tpu.core_type<tc>, window_params = [{transform_indices = @transform_0, window_bounds = array<i64: 16, 32>}, {pipeline_mode = #tpu.pipeline_mode<synchronous>, transform_indices = @transform_1, window_bounds = array<i64: 32, 32>}, {pipeline_mode = #tpu.pipeline_mode<synchronous>, transform_indices = @transform_2, window_bounds = array<i64: 1, 32>}, {transform_indices = @transform_3, window_bounds = array<i64: 16, 32>}]} {
    %c0 = arith.constant 0 : index
    %c0_0 = arith.constant 0 : index
    %0 = vector.load %arg1[%c0, %c0_0] : memref<16x32xbf16, #tpu.memory_space<vmem>>, vector<16x32xbf16>
    %c0_1 = arith.constant 0 : index
    %c0_2 = arith.constant 0 : index
    %1 = vector.load %arg2[%c0_1, %c0_2] : memref<32x32xbf16, #tpu.memory_space<vmem>>, vector<32x32xbf16>
    %cst = arith.constant dense<0.000000e+00> : vector<16x32xf32>
    %2 = tpu.matmul %0, %1, %cst {dimension_numbers = #tpu.dot_dimension_numbers<[1], [0], [0], [1], [0, 0, 1, 1], [], []>} : vector<16x32xbf16>, vector<32x32xbf16>, vector<16x32xf32> -> vector<16x32xf32>
    %c0_3 = arith.constant 0 : index
    %c0_4 = arith.constant 0 : index
    %3 = vector.load %arg3[%c0_3, %c0_4] : memref<1x32xf32, #tpu.memory_space<vmem>>, vector<1x32xf32>
    %4 = vector.broadcast %3 : vector<1x32xf32> to vector<16x32xf32>
    %5 = arith.addf %2, %4 : vector<16x32xf32>
    %c0_5 = arith.constant 0 : index
    %c0_6 = arith.constant 0 : index
    %6 = vector.load %arg4[%c0_5, %c0_6] : memref<16x32xf32, #tpu.memory_space<vmem>>, vector<16x32xf32>
    tpu.vector_store %arg4[%c0_5, %c0_6], %5 {strides = array<i32>} : memref<16x32xf32, #tpu.memory_space<vmem>>, vector<16x32xf32>,
    return
  }
  func.func @transform_0(%arg0: i32) -> (i32, i32) {
    %c0_i32 = arith.constant 0 : i32
    %c0_i32_0 = arith.constant 0 : i32
    return %arg0, %c0_i32 : i32, i32
  }
  func.func @transform_1(%arg0: i32) -> (i32, i32) {
    %c0_i32 = arith.constant 0 : i32
    %c0_i32_0 = arith.constant 0 : i32
    %c0_i32_1 = arith.constant 0 : i32
    return %c0_i32, %c0_i32_0 : i32, i32
  }
  func.func @transform_2(%arg0: i32) -> (i32, i32) {
    %c0_i32 = arith.constant 0 : i32
    %c0_i32_0 = arith.constant 0 : i32
    %c0_i32_1 = arith.constant 0 : i32
    return %c0_i32, %c0_i32_0 : i32, i32
  }
  func.func @transform_3(%arg0: i32) -> (i32, i32) {
    %c0_i32 = arith.constant 0 : i32
    %c0_i32_0 = arith.constant 0 : i32
    return %arg0, %c0_i32 : i32, i32
  }
}

module attributes {stable_mosaic.version = 11 : i64} {
  func.func @qkv_proj_kernel(%arg0: i32, %arg1: memref<16x32xf32, #tpu.memory_space<vmem>>, %arg2: memref<32x32xbf16, #tpu.memory_space<vmem>>, %arg3: memref<1x32xf32, #tpu.memory_space<vmem>>, %arg4: memref<32x32xbf16, #tpu.memory_space<vmem>>, %arg5: memref<1x32xf32, #tpu.memory_space<vmem>>, %arg6: memref<32x32xbf16, #tpu.memory_space<vmem>>, %arg7: memref<1x32xf32, #tpu.memory_space<vmem>>, %arg8: memref<16x32xbf16, #tpu.memory_space<vmem>>, %arg9: memref<16x32xbf16, #tpu.memory_space<vmem>>, %arg10: memref<16x32xbf16, #tpu.memory_space<vmem>>) attributes {dimension_semantics = [#tpu.dimension_semantics<parallel>], iteration_bounds = array<i64: 1>, scalar_prefetch = 0 : i64, scratch_operands = 0 : i64, tpu.core_type = #tpu.core_type<tc>, window_params = [{transform_indices = @transform_0, window_bounds = array<i64: 16, 32>}, {pipeline_mode = #tpu.pipeline_mode<synchronous>, transform_indices = @transform_1, window_bounds = array<i64: 32, 32>}, {pipeline_mode = #tpu.pipeline_mode<synchronous>, transform_indices = @transform_2, window_bounds = array<i64: 1, 32>}, {pipeline_mode = #tpu.pipeline_mode<synchronous>, transform_indices = @transform_3, window_bounds = array<i64: 32, 32>}, {pipeline_mode = #tpu.pipeline_mode<synchronous>, transform_indices = @transform_4, window_bounds = array<i64: 1, 32>}, {pipeline_mode = #tpu.pipeline_mode<synchronous>, transform_indices = @transform_5, window_bounds = array<i64: 32, 32>}, {pipeline_mode = #tpu.pipeline_mode<synchronous>, transform_indices = @transform_6, window_bounds = array<i64: 1, 32>}, {transform_indices = @transform_7, window_bounds = array<i64: 16, 32>}, {transform_indices = @transform_8, window_bounds = array<i64: 16, 32>}, {transform_indices = @transform_9, window_bounds = array<i64: 16, 32>}]} {
    %c0 = arith.constant 0 : index
    %c0_0 = arith.constant 0 : index
    %0 = vector.load %arg1[%c0, %c0_0] : memref<16x32xf32, #tpu.memory_space<vmem>>, vector<16x32xf32>
    %1 = arith.truncf %0 : vector<16x32xf32> to vector<16x32xbf16>
    %c0_1 = arith.constant 0 : index
    %c0_2 = arith.constant 0 : index
    %2 = vector.load %arg2[%c0_1, %c0_2] : memref<32x32xbf16, #tpu.memory_space<vmem>>, vector<32x32xbf16>
    %cst = arith.constant dense<0.000000e+00> : vector<16x32xf32>
    %3 = tpu.matmul %1, %2, %cst {dimension_numbers = #tpu.dot_dimension_numbers<[1], [0], [0], [1], [0, 0, 1, 1], [], []>} : vector<16x32xbf16>, vector<32x32xbf16>, vector<16x32xf32> -> vector<16x32xf32>
    %c0_3 = arith.constant 0 : index
    %c0_4 = arith.constant 0 : index
    %4 = vector.load %arg3[%c0_3, %c0_4] : memref<1x32xf32, #tpu.memory_space<vmem>>, vector<1x32xf32>
    %5 = vector.broadcast %4 : vector<1x32xf32> to vector<16x32xf32>
    %6 = arith.addf %3, %5 : vector<16x32xf32>
    %c0_5 = arith.constant 0 : index
    %c0_6 = arith.constant 0 : index
    %7 = vector.load %arg4[%c0_5, %c0_6] : memref<32x32xbf16, #tpu.memory_space<vmem>>, vector<32x32xbf16>
    %cst_7 = arith.constant dense<0.000000e+00> : vector<16x32xf32>
    %8 = tpu.matmul %1, %7, %cst_7 {dimension_numbers = #tpu.dot_dimension_numbers<[1], [0], [0], [1], [0, 0, 1, 1], [], []>} : vector<16x32xbf16>, vector<32x32xbf16>, vector<16x32xf32> -> vector<16x32xf32>
    %c0_8 = arith.constant 0 : index
    %c0_9 = arith.constant 0 : index
    %9 = vector.load %arg5[%c0_8, %c0_9] : memref<1x32xf32, #tpu.memory_space<vmem>>, vector<1x32xf32>
    %10 = vector.broadcast %9 : vector<1x32xf32> to vector<16x32xf32>
    %11 = arith.addf %8, %10 : vector<16x32xf32>
    %c0_10 = arith.constant 0 : index
    %c0_11 = arith.constant 0 : index
    %12 = vector.load %arg6[%c0_10, %c0_11] : memref<32x32xbf16, #tpu.memory_space<vmem>>, vector<32x32xbf16>
    %cst_12 = arith.constant dense<0.000000e+00> : vector<16x32xf32>
    %13 = tpu.matmul %1, %12, %cst_12 {dimension_numbers = #tpu.dot_dimension_numbers<[1], [0], [0], [1], [0, 0, 1, 1], [], []>} : vector<16x32xbf16>, vector<32x32xbf16>, vector<16x32xf32> -> vector<16x32xf32>
    %c0_13 = arith.constant 0 : index
    %c0_14 = arith.constant 0 : index
    %14 = vector.load %arg7[%c0_13, %c0_14] : memref<1x32xf32, #tpu.memory_space<vmem>>, vector<1x32xf32>
    %15 = vector.broadcast %14 : vector<1x32xf32> to vector<16x32xf32>
    %16 = arith.addf %13, %15 : vector<16x32xf32>
    %17 = arith.truncf %6 : vector<16x32xf32> to vector<16x32xbf16>
    %c0_15 = arith.constant 0 : index
    %c0_16 = arith.constant 0 : index
    %18 = vector.load %arg8[%c0_15, %c0_16] : memref<16x32xbf16, #tpu.memory_space<vmem>>, vector<16x32xbf16>
    tpu.vector_store %arg8[%c0_15, %c0_16], %17 {strides = array<i32>} : memref<16x32xbf16, #tpu.memory_space<vmem>>, vector<16x32xbf16>,
    %19 = arith.truncf %11 : vector<16x32xf32> to vector<16x32xbf16>
    %c0_17 = arith.constant 0 : index
    %c0_18 = arith.constant 0 : index
    %20 = vector.load %arg9[%c0_17, %c0_18] : memref<16x32xbf16, #tpu.memory_space<vmem>>, vector<16x32xbf16>
    tpu.vector_store %arg9[%c0_17, %c0_18], %19 {strides = array<i32>} : memref<16x32xbf16, #tpu.memory_space<vmem>>, vector<16x32xbf16>,
    %21 = arith.truncf %16 : vector<16x32xf32> to vector<16x32xbf16>
    %c0_19 = arith.constant 0 : index
    %c0_20 = arith.constant 0 : index
    %22 = vector.load %arg10[%c0_19, %c0_20] : memref<16x32xbf16, #tpu.memory_space<vmem>>, vector<16x32xbf16>
    tpu.vector_store %arg10[%c0_19, %c0_20], %21 {strides = array<i32>} : memref<16x32xbf16, #tpu.memory_space<vmem>>, vector<16x32xbf16>,
    return
  }
  func.func @transform_0(%arg0: i32) -> (i32, i32) {
    %c0_i32 = arith.constant 0 : i32
    %c0_i32_0 = arith.constant 0 : i32
    return %arg0, %c0_i32 : i32, i32
  }
  func.func @transform_1(%arg0: i32) -> (i32, i32) {
    %c0_i32 = arith.constant 0 : i32
    %c0_i32_0 = arith.constant 0 : i32
    %c0_i32_1 = arith.constant 0 : i32
    return %c0_i32, %c0_i32_0 : i32, i32
  }
  func.func @transform_2(%arg0: i32) -> (i32, i32) {
    %c0_i32 = arith.constant 0 : i32
    %c0_i32_0 = arith.constant 0 : i32
    %c0_i32_1 = arith.constant 0 : i32
    return %c0_i32, %c0_i32_0 : i32, i32
  }
  func.func @transform_3(%arg0: i32) -> (i32, i32) {
    %c0_i32 = arith.constant 0 : i32
    %c0_i32_0 = arith.constant 0 : i32
    %c0_i32_1 = arith.constant 0 : i32
    return %c0_i32, %c0_i32_0 : i32, i32
  }
  func.func @transform_4(%arg0: i32) -> (i32, i32) {
    %c0_i32 = arith.constant 0 : i32
    %c0_i32_0 = arith.constant 0 : i32
    %c0_i32_1 = arith.constant 0 : i32
    return %c0_i32, %c0_i32_0 : i32, i32
  }
  func.func @transform_5(%arg0: i32) -> (i32, i32) {
    %c0_i32 = arith.constant 0 : i32
    %c0_i32_0 = arith.constant 0 : i32
    %c0_i32_1 = arith.constant 0 : i32
    return %c0_i32, %c0_i32_0 : i32, i32
  }
  func.func @transform_6(%arg0: i32) -> (i32, i32) {
    %c0_i32 = arith.constant 0 : i32
    %c0_i32_0 = arith.constant 0 : i32
    %c0_i32_1 = arith.constant 0 : i32
    return %c0_i32, %c0_i32_0 : i32, i32
  }
  func.func @transform_7(%arg0: i32) -> (i32, i32) {
    %c0_i32 = arith.constant 0 : i32
    %c0_i32_0 = arith.constant 0 : i32
    return %arg0, %c0_i32 : i32, i32
  }
  func.func @transform_8(%arg0: i32) -> (i32, i32) {
    %c0_i32 = arith.constant 0 : i32
    %c0_i32_0 = arith.constant 0 : i32
    return %arg0, %c0_i32 : i32, i32
  }
  func.func @transform_9(%arg0: i32) -> (i32, i32) {
    %c0_i32 = arith.constant 0 : i32
    %c0_i32_0 = arith.constant 0 : i32
    return %arg0, %c0_i32 : i32, i32
  }
}

module attributes {stable_mosaic.version = 11 : i64} {
  func.func @attention_core_kernel(%arg0: i32, %arg1: i32, %arg2: memref<1x8x32xbf16, #tpu.memory_space<vmem>>, %arg3: memref<1x8x32xbf16, #tpu.memory_space<vmem>>, %arg4: memref<1x8x32xbf16, #tpu.memory_space<vmem>>, %arg5: memref<1x8x32xbf16, #tpu.memory_space<vmem>>) attributes {dimension_semantics = [#tpu.dimension_semantics<parallel>, #tpu.dimension_semantics<parallel>], iteration_bounds = array<i64: 2, 1>, scalar_prefetch = 0 : i64, scratch_operands = 0 : i64, tpu.core_type = #tpu.core_type<tc>, window_params = [{transform_indices = @transform_0, window_bounds = array<i64: 1, 8, 32>}, {transform_indices = @transform_1, window_bounds = array<i64: 1, 8, 32>}, {transform_indices = @transform_2, window_bounds = array<i64: 1, 8, 32>}, {transform_indices = @transform_3, window_bounds = array<i64: 1, 8, 32>}]} {
    %c0 = arith.constant 0 : index
    %c0_0 = arith.constant 0 : index
    %c0_1 = arith.constant 0 : index
    %0 = vector.load %arg2[%c0, %c0_0, %c0_1] : memref<1x8x32xbf16, #tpu.memory_space<vmem>>, vector<1x8x32xbf16>
    %1 = vector.shape_cast %0 : vector<1x8x32xbf16> to vector<8x32xbf16>
    %c0_2 = arith.constant 0 : index
    %c0_3 = arith.constant 0 : index
    %c0_4 = arith.constant 0 : index
    %2 = vector.load %arg3[%c0_2, %c0_3, %c0_4] : memref<1x8x32xbf16, #tpu.memory_space<vmem>>, vector<1x8x32xbf16>
    %3 = vector.shape_cast %2 : vector<1x8x32xbf16> to vector<8x32xbf16>
    %c0_5 = arith.constant 0 : index
    %c0_6 = arith.constant 0 : index
    %c0_7 = arith.constant 0 : index
    %4 = vector.load %arg4[%c0_5, %c0_6, %c0_7] : memref<1x8x32xbf16, #tpu.memory_space<vmem>>, vector<1x8x32xbf16>
    %5 = vector.shape_cast %4 : vector<1x8x32xbf16> to vector<8x32xbf16>
    %6 = vector.extract_strided_slice %1 {offsets = [0, 0], sizes = [8, 8], strides = [1, 1]} : vector<8x32xbf16> to vector<8x8xbf16>
    %7 = vector.extract_strided_slice %3 {offsets = [0, 0], sizes = [8, 8], strides = [1, 1]} : vector<8x32xbf16> to vector<8x8xbf16>
    %8 = vector.extract_strided_slice %5 {offsets = [0, 0], sizes = [8, 8], strides = [1, 1]} : vector<8x32xbf16> to vector<8x8xbf16>
    %cst = arith.constant dense<0.000000e+00> : vector<8x8xf32>
    %9 = tpu.matmul %6, %7, %cst {dimension_numbers = #tpu.dot_dimension_numbers<[1], [1], [0], [0], [0, 0, 1, 0], [], []>} : vector<8x8xbf16>, vector<8x8xbf16>, vector<8x8xf32> -> vector<8x8xf32>
    %cst_8 = arith.constant dense<0xFF800000> : vector<8xf32>
    %10 = vector.multi_reduction <maximumf>, %9, %cst_8 [1] : vector<8x8xf32> to vector<8xf32>
    %11 = vector.shape_cast %10 : vector<8xf32> to vector<8x1xf32>
    %12 = vector.broadcast %11 : vector<8x1xf32> to vector<8x8xf32>
    %13 = arith.subf %9, %12 : vector<8x8xf32>
    %14 = math.exp %13 : vector<8x8xf32>
    %cst_9 = arith.constant dense<0.000000e+00> : vector<8xf32>
    %15 = vector.multi_reduction <add>, %14, %cst_9 [1] : vector<8x8xf32> to vector<8xf32>
    %16 = vector.shape_cast %15 : vector<8xf32> to vector<8x1xf32>
    %17 = arith.truncf %14 : vector<8x8xf32> to vector<8x8xbf16>
    %cst_10 = arith.constant dense<0.000000e+00> : vector<8x8xf32>
    %18 = tpu.matmul %17, %8, %cst_10 {dimension_numbers = #tpu.dot_dimension_numbers<[1], [0], [0], [1], [0, 0, 1, 1], [], []>} : vector<8x8xbf16>, vector<8x8xbf16>, vector<8x8xf32> -> vector<8x8xf32>
    %19 = tpu.reciprocal %16 {approx = true} : vector<8x1xf32> -> vector<8x1xf32>
    %20 = vector.broadcast %19 : vector<8x1xf32> to vector<8x8xf32>
    %21 = arith.mulf %18, %20 : vector<8x8xf32>
    %22 = arith.truncf %21 : vector<8x8xf32> to vector<8x8xbf16>
    %c0_11 = arith.constant 0 : index
    %c0_12 = arith.constant 0 : index
    %c0_13 = arith.constant 0 : index
    %23 = vector.load %arg5[%c0_11, %c0_12, %c0_13] : memref<1x8x32xbf16, #tpu.memory_space<vmem>>, vector<1x8x8xbf16>
    %24 = vector.shape_cast %23 : vector<1x8x8xbf16> to vector<8x8xbf16>
    %25 = vector.shape_cast %22 : vector<8x8xbf16> to vector<1x8x8xbf16>
    tpu.vector_store %arg5[%c0_11, %c0_12, %c0_13], %25 {strides = array<i32>} : memref<1x8x32xbf16, #tpu.memory_space<vmem>>, vector<1x8x8xbf16>,
    %26 = vector.extract_strided_slice %1 {offsets = [0, 8], sizes = [8, 8], strides = [1, 1]} : vector<8x32xbf16> to vector<8x8xbf16>
    %27 = vector.extract_strided_slice %3 {offsets = [0, 8], sizes = [8, 8], strides = [1, 1]} : vector<8x32xbf16> to vector<8x8xbf16>
    %28 = vector.extract_strided_slice %5 {offsets = [0, 8], sizes = [8, 8], strides = [1, 1]} : vector<8x32xbf16> to vector<8x8xbf16>
    %cst_14 = arith.constant dense<0.000000e+00> : vector<8x8xf32>
    %29 = tpu.matmul %26, %27, %cst_14 {dimension_numbers = #tpu.dot_dimension_numbers<[1], [1], [0], [0], [0, 0, 1, 0], [], []>} : vector<8x8xbf16>, vector<8x8xbf16>, vector<8x8xf32> -> vector<8x8xf32>
    %cst_15 = arith.constant dense<0xFF800000> : vector<8xf32>
    %30 = vector.multi_reduction <maximumf>, %29, %cst_15 [1] : vector<8x8xf32> to vector<8xf32>
    %31 = vector.shape_cast %30 : vector<8xf32> to vector<8x1xf32>
    %32 = vector.broadcast %31 : vector<8x1xf32> to vector<8x8xf32>
    %33 = arith.subf %29, %32 : vector<8x8xf32>
    %34 = math.exp %33 : vector<8x8xf32>
    %cst_16 = arith.constant dense<0.000000e+00> : vector<8xf32>
    %35 = vector.multi_reduction <add>, %34, %cst_16 [1] : vector<8x8xf32> to vector<8xf32>
    %36 = vector.shape_cast %35 : vector<8xf32> to vector<8x1xf32>
    %37 = arith.truncf %34 : vector<8x8xf32> to vector<8x8xbf16>
    %cst_17 = arith.constant dense<0.000000e+00> : vector<8x8xf32>
    %38 = tpu.matmul %37, %28, %cst_17 {dimension_numbers = #tpu.dot_dimension_numbers<[1], [0], [0], [1], [0, 0, 1, 1], [], []>} : vector<8x8xbf16>, vector<8x8xbf16>, vector<8x8xf32> -> vector<8x8xf32>
    %39 = tpu.reciprocal %36 {approx = true} : vector<8x1xf32> -> vector<8x1xf32>
    %40 = vector.broadcast %39 : vector<8x1xf32> to vector<8x8xf32>
    %41 = arith.mulf %38, %40 : vector<8x8xf32>
    %42 = arith.truncf %41 : vector<8x8xf32> to vector<8x8xbf16>
    %c0_18 = arith.constant 0 : index
    %c0_19 = arith.constant 0 : index
    %c8 = arith.constant 8 : index
    %43 = vector.load %arg5[%c0_18, %c0_19, %c8] : memref<1x8x32xbf16, #tpu.memory_space<vmem>>, vector<1x8x8xbf16>
    %44 = vector.shape_cast %43 : vector<1x8x8xbf16> to vector<8x8xbf16>
    %45 = vector.shape_cast %42 : vector<8x8xbf16> to vector<1x8x8xbf16>
    tpu.vector_store %arg5[%c0_18, %c0_19, %c8], %45 {strides = array<i32>} : memref<1x8x32xbf16, #tpu.memory_space<vmem>>, vector<1x8x8xbf16>,
    %46 = vector.extract_strided_slice %1 {offsets = [0, 16], sizes = [8, 8], strides = [1, 1]} : vector<8x32xbf16> to vector<8x8xbf16>
    %47 = vector.extract_strided_slice %3 {offsets = [0, 16], sizes = [8, 8], strides = [1, 1]} : vector<8x32xbf16> to vector<8x8xbf16>
    %48 = vector.extract_strided_slice %5 {offsets = [0, 16], sizes = [8, 8], strides = [1, 1]} : vector<8x32xbf16> to vector<8x8xbf16>
    %cst_20 = arith.constant dense<0.000000e+00> : vector<8x8xf32>
    %49 = tpu.matmul %46, %47, %cst_20 {dimension_numbers = #tpu.dot_dimension_numbers<[1], [1], [0], [0], [0, 0, 1, 0], [], []>} : vector<8x8xbf16>, vector<8x8xbf16>, vector<8x8xf32> -> vector<8x8xf32>
    %cst_21 = arith.constant dense<0xFF800000> : vector<8xf32>
    %50 = vector.multi_reduction <maximumf>, %49, %cst_21 [1] : vector<8x8xf32> to vector<8xf32>
    %51 = vector.shape_cast %50 : vector<8xf32> to vector<8x1xf32>
    %52 = vector.broadcast %51 : vector<8x1xf32> to vector<8x8xf32>
    %53 = arith.subf %49, %52 : vector<8x8xf32>
    %54 = math.exp %53 : vector<8x8xf32>
    %cst_22 = arith.constant dense<0.000000e+00> : vector<8xf32>
    %55 = vector.multi_reduction <add>, %54, %cst_22 [1] : vector<8x8xf32> to vector<8xf32>
    %56 = vector.shape_cast %55 : vector<8xf32> to vector<8x1xf32>
    %57 = arith.truncf %54 : vector<8x8xf32> to vector<8x8xbf16>
    %cst_23 = arith.constant dense<0.000000e+00> : vector<8x8xf32>
    %58 = tpu.matmul %57, %48, %cst_23 {dimension_numbers = #tpu.dot_dimension_numbers<[1], [0], [0], [1], [0, 0, 1, 1], [], []>} : vector<8x8xbf16>, vector<8x8xbf16>, vector<8x8xf32> -> vector<8x8xf32>
    %59 = tpu.reciprocal %56 {approx = true} : vector<8x1xf32> -> vector<8x1xf32>
    %60 = vector.broadcast %59 : vector<8x1xf32> to vector<8x8xf32>
    %61 = arith.mulf %58, %60 : vector<8x8xf32>
    %62 = arith.truncf %61 : vector<8x8xf32> to vector<8x8xbf16>
    %c0_24 = arith.constant 0 : index
    %c0_25 = arith.constant 0 : index
    %c16 = arith.constant 16 : index
    %63 = vector.load %arg5[%c0_24, %c0_25, %c16] : memref<1x8x32xbf16, #tpu.memory_space<vmem>>, vector<1x8x8xbf16>
    %64 = vector.shape_cast %63 : vector<1x8x8xbf16> to vector<8x8xbf16>
    %65 = vector.shape_cast %62 : vector<8x8xbf16> to vector<1x8x8xbf16>
    tpu.vector_store %arg5[%c0_24, %c0_25, %c16], %65 {strides = array<i32>} : memref<1x8x32xbf16, #tpu.memory_space<vmem>>, vector<1x8x8xbf16>,
    %66 = vector.extract_strided_slice %1 {offsets = [0, 24], sizes = [8, 8], strides = [1, 1]} : vector<8x32xbf16> to vector<8x8xbf16>
    %67 = vector.extract_strided_slice %3 {offsets = [0, 24], sizes = [8, 8], strides = [1, 1]} : vector<8x32xbf16> to vector<8x8xbf16>
    %68 = vector.extract_strided_slice %5 {offsets = [0, 24], sizes = [8, 8], strides = [1, 1]} : vector<8x32xbf16> to vector<8x8xbf16>
    %cst_26 = arith.constant dense<0.000000e+00> : vector<8x8xf32>
    %69 = tpu.matmul %66, %67, %cst_26 {dimension_numbers = #tpu.dot_dimension_numbers<[1], [1], [0], [0], [0, 0, 1, 0], [], []>} : vector<8x8xbf16>, vector<8x8xbf16>, vector<8x8xf32> -> vector<8x8xf32>
    %cst_27 = arith.constant dense<0xFF800000> : vector<8xf32>
    %70 = vector.multi_reduction <maximumf>, %69, %cst_27 [1] : vector<8x8xf32> to vector<8xf32>
    %71 = vector.shape_cast %70 : vector<8xf32> to vector<8x1xf32>
    %72 = vector.broadcast %71 : vector<8x1xf32> to vector<8x8xf32>
    %73 = arith.subf %69, %72 : vector<8x8xf32>
    %74 = math.exp %73 : vector<8x8xf32>
    %cst_28 = arith.constant dense<0.000000e+00> : vector<8xf32>
    %75 = vector.multi_reduction <add>, %74, %cst_28 [1] : vector<8x8xf32> to vector<8xf32>
    %76 = vector.shape_cast %75 : vector<8xf32> to vector<8x1xf32>
    %77 = arith.truncf %74 : vector<8x8xf32> to vector<8x8xbf16>
    %cst_29 = arith.constant dense<0.000000e+00> : vector<8x8xf32>
    %78 = tpu.matmul %77, %68, %cst_29 {dimension_numbers = #tpu.dot_dimension_numbers<[1], [0], [0], [1], [0, 0, 1, 1], [], []>} : vector<8x8xbf16>, vector<8x8xbf16>, vector<8x8xf32> -> vector<8x8xf32>
    %79 = tpu.reciprocal %76 {approx = true} : vector<8x1xf32> -> vector<8x1xf32>
    %80 = vector.broadcast %79 : vector<8x1xf32> to vector<8x8xf32>
    %81 = arith.mulf %78, %80 : vector<8x8xf32>
    %82 = arith.truncf %81 : vector<8x8xf32> to vector<8x8xbf16>
    %c0_30 = arith.constant 0 : index
    %c0_31 = arith.constant 0 : index
    %c24 = arith.constant 24 : index
    %83 = vector.load %arg5[%c0_30, %c0_31, %c24] : memref<1x8x32xbf16, #tpu.memory_space<vmem>>, vector<1x8x8xbf16>
    %84 = vector.shape_cast %83 : vector<1x8x8xbf16> to vector<8x8xbf16>
    %85 = vector.shape_cast %82 : vector<8x8xbf16> to vector<1x8x8xbf16>
    tpu.vector_store %arg5[%c0_30, %c0_31, %c24], %85 {strides = array<i32>} : memref<1x8x32xbf16, #tpu.memory_space<vmem>>, vector<1x8x8xbf16>,
    return
  }
  func.func @transform_0(%arg0: i32, %arg1: i32) -> (i32, i32, i32) {
    %c0_i32 = arith.constant 0 : i32
    %c0_i32_0 = arith.constant 0 : i32
    return %arg0, %c0_i32, %arg1 : i32, i32, i32
  }
  func.func @transform_1(%arg0: i32, %arg1: i32) -> (i32, i32, i32) {
    %c0_i32 = arith.constant 0 : i32
    %c0_i32_0 = arith.constant 0 : i32
    return %arg0, %c0_i32, %arg1 : i32, i32, i32
  }
  func.func @transform_2(%arg0: i32, %arg1: i32) -> (i32, i32, i32) {
    %c0_i32 = arith.constant 0 : i32
    %c0_i32_0 = arith.constant 0 : i32
    return %arg0, %c0_i32, %arg1 : i32, i32, i32
  }
  func.func @transform_3(%arg0: i32, %arg1: i32) -> (i32, i32, i32) {
    %c0_i32 = arith.constant 0 : i32
    %c0_i32_0 = arith.constant 0 : i32
    return %arg0, %c0_i32, %arg1 : i32, i32, i32
  }
}

</mosaic_0001>

<llo_original>
// kernel: clip_attention_forward.5
$region0: #{clip_attention_forward.5}
  #allocation0 [shape = 'u32[]', space=smem, size = 0x4, offset = 0x4, fixed_abs, tag = 'smem constant byte address 0x4 - core index']
  #allocation1 [shape = 'u32[144,128]{1,0:T(1,128)}', space=vmem, size = 0x12000, scoped, tag = 'internal scratch']
  %s0 = inlined_call_operand.vmem [shape: bf16[16,32], index: 0, kind: input, shape index: {}]
  %s1 = inlined_call_operand.vmem [shape: bf16[32,32], index: 1, kind: input, shape index: {}]
  %s2 = inlined_call_operand.vmem [shape: f32[1,32], index: 2, kind: input, shape index: {}]
  %s3 = inlined_call_operand.hbm [shape: f32[16,32], index: 3, kind: output, shape index: {}]
  %s4 = sld [smem:[#allocation0]]
  $region22: #{clip_attention_forward.5} parent=0
    _
  %s6 = ssub.s32 1, %s4
  %s7 = scalar_select 0, %s6, %s4
  $region1: #{clip_attention_forward.5} parent=0
    #allocation2 [shape = 'u8[8192]{0}', space=vmem, size = 0x2000, scoped, tag = 'output window, operand 0, single buffered']
    #allocation3 [shape = 's32[1]{0}', space=sflag, size = 0x4, scoped, tag = 'scoped memory for clip_attention_forward.5']
    %8 = vsyncpa [#allocation3], 0
    // Predicated region
    $region2: #{clip_attention_forward.5} parent=1 // pred_check
      _
    $region3: #{clip_attention_forward.5} parent=1 // pred_check_branch
      %10 = sbr.rel (0) target = $region5
    $region4: #{clip_attention_forward.5} parent=1 // pred_region
      _
    $region5: #{clip_attention_forward.5} parent=1 // pred_fallthru
      _
    // Predicated region
    $region6: #{clip_attention_forward.5} parent=1 // pred_check
      _
    $region7: #{clip_attention_forward.5} parent=1 // pred_check_branch
      %12 = sbr.rel (0) target = $region9
    $region8: #{clip_attention_forward.5} parent=1 // pred_region
      _
    $region9: #{clip_attention_forward.5} parent=1 // pred_fallthru
      _
    // Predicated region
    $region10: #{clip_attention_forward.5} parent=1 // pred_check
      _
    $region11: #{clip_attention_forward.5} parent=1 // pred_check_branch
      %14 = sbr.rel (0) target = $region13
    $region12: #{clip_attention_forward.5} parent=1 // pred_region
      _
    $region13: #{clip_attention_forward.5} parent=1 // pred_fallthru
      _
    %v16 = vld [vmem:[%s0] sm:$0xf]
    %v17 = vld [vmem:[%s0 + $0x4] sm:$0xf]
    %v18 = vld [vmem:[%s1] sm:$0xf]
    %v19 = vld [vmem:[%s1 + $0x4] sm:$0xf]
    %v20 = vld [vmem:[%s1 + $0x8] sm:$0xf]
    %v21 = vld [vmem:[%s1 + $0xc] sm:$0xf]
    %v22 = vld [vmem:[%s2] sm:$0x1]
    %v24 = vlaneseq
    %v25 = vshrl.u32 %v24, 7
    %v26 = vsub.s32 0, %v25
    %v27 = vrot.slane %v22, %v26
    %v31 = vunpack.c.l.b16 %v16
    %v32 = vunpack.c.l.b16 %v17
    %v33 = vpack.c.b16 %v32, %v31
    %v38 = vunpack.c.l.b16 %v18
    %v39 = vunpack.c.l.b16 %v19
    %v40 = vunpack.c.l.b16 %v20
    %v41 = vunpack.c.l.b16 %v21
    %v42 = vpack.c.b16 %v39, %v38
    %v43 = vpack.c.b16 %v41, %v40
    %vm46 = vcmask 261120
    %v48 = vsel %vm46, %v33, 0
    %50 = vmatprep.subr.bf16.mxu0 0
    %51 = vmatpush1.bf16.msra.mxu0 %v42
    %52 = vmatprep.subr.bf16.mxu0 0
    %53 = vmatpush1.bf16.msra.mxu0 %v43
    %54 = vmatprep.subr.bf16.mxu0 0
    %55 = vmatpush1.bf16.msra.mxu0 0
    %56 = vmatprep.subr.bf16.mxu0 0
    %57 = vmatpush1.bf16.msra.mxu0 0
    %58 = vmatprep.subr.bf16.mxu0 0
    %59 = vmatpush1.bf16.msra.mxu0 0
    %60 = vmatprep.subr.bf16.mxu0 0
    %61 = vmatpush1.bf16.msra.mxu0 0
    %62 = vmatprep.subr.bf16.mxu0 0
    %63 = vmatpush1.bf16.msra.mxu0 0
    %64 = vmatprep.subr.bf16.mxu0 0
    %65 = vmatpush1.bf16.msra.mxu0 0
    %66 = vmatprep.subr.bf16.mxu0 0
    %67 = vmatpush1.bf16.msra.mxu0 0
    %68 = vmatprep.subr.bf16.mxu0 0
    %69 = vmatpush1.bf16.msra.mxu0 0
    %70 = vmatprep.subr.bf16.mxu0 0
    %71 = vmatpush1.bf16.msra.mxu0 0
    %72 = vmatprep.subr.bf16.mxu0 0
    %73 = vmatpush1.bf16.msra.mxu0 0
    %74 = vmatprep.subr.bf16.mxu0 0
    %75 = vmatpush1.bf16.msra.mxu0 0
    %76 = vmatprep.subr.bf16.mxu0 0
    %77 = vmatpush1.bf16.msra.mxu0 0
    %78 = vmatprep.subr.bf16.mxu0 0
    %79 = vmatpush1.bf16.msra.mxu0 0
    %80 = vmatprep.subr.bf16.mxu0 0
    %81 = vmatpush1.bf16.msra.mxu0 0
    %82 = vmatprep.mubr.bf16.mxu0 0
    %83 = vmatmul.mubr.bf16.gmra.mrb[0].mxu0 %v48
    %v84 = vpop.f32.mrb[0].mxu0
    %v85 = vadd.f32 %v27, %v84
    %v86 = vpop.f32.mrb[0].mxu0
    %v87 = vpop.f32.mrb[0].mxu0
    %v88 = vadd.f32 %v27, %v87
    %v89 = vpop.f32.mrb[0].mxu0
    %90 = vdwg.mxu0
    %91 = vst.msk [vmem:[#allocation2] sm:$0xff] %vm46, %v85
    %92 = vst.msk [vmem:[#allocation2 + $0x8] sm:$0xff] %vm46, %v88
    // Predicated region
    $region14: #{clip_attention_forward.5} parent=1 // pred_check
      _
    $region15: #{clip_attention_forward.5} parent=1 // pred_check_branch
      %94 = sbr.rel (0) target = $region17
    $region16: #{clip_attention_forward.5} parent=1 // pred_region
      %s96 = ssub.s32 256, 256
      %97 = vsyncadd [#allocation3], %s96
      %s98 = sshll.u32 [#allocation2], 4
      %s99 = int_to_ptr.vmem [resolvable:$true] %s98
      %104 = dma.vmem_to_hbm [thread:$0]  %s99, 256, %s3, [#allocation3], 128, 128, 8
    $region17: #{clip_attention_forward.5} parent=1 // pred_fallthru
      _
    // Predicated region
    $region18: #{clip_attention_forward.5} parent=1 // pred_check
      _
    $region19: #{clip_attention_forward.5} parent=1 // pred_check_branch
      %106 = sbr.rel (0) target = $region21
    $region20: #{clip_attention_forward.5} parent=1 // pred_region
      %107 = dma.done [#allocation3], 256
    $region21: #{clip_attention_forward.5} parent=1 // pred_fallthru
      _
    %108 = vsyncpa [#allocation3], 1

// kernel: clip_attention_forward.3
$region0: #{clip_attention_forward.3}
  #allocation0 [shape = 'u32[]', space=smem, size = 0x4, offset = 0x4, fixed_abs, tag = 'smem constant byte address 0x4 - core index']
  #allocation1 [shape = 'u32[144,128]{1,0:T(1,128)}', space=vmem, size = 0x12000, scoped, tag = 'internal scratch']
  %s0 = inlined_call_operand.vmem [shape: f32[16,32], index: 0, kind: input, shape index: {}]
  %s1 = inlined_call_operand.hbm [shape: bf16[32,32], index: 1, kind: input, shape index: {}]
  %s2 = inlined_call_operand.vmem [shape: f32[1,32], index: 2, kind: input, shape index: {}]
  %s3 = inlined_call_operand.hbm [shape: bf16[32,32], index: 3, kind: input, shape index: {}]
  %s4 = inlined_call_operand.vmem [shape: f32[1,32], index: 4, kind: input, shape index: {}]
  %s5 = inlined_call_operand.hbm [shape: bf16[32,32], index: 5, kind: input, shape index: {}]
  %s6 = inlined_call_operand.vmem [shape: f32[1,32], index: 6, kind: input, shape index: {}]
  %s7 = inlined_call_operand.vmem [shape: bf16[16,32], index: 7, kind: output, shape index: {0}]
  %s8 = inlined_call_operand.vmem [shape: bf16[16,32], index: 8, kind: output, shape index: {1}]
  %s9 = inlined_call_operand.vmem [shape: bf16[16,32], index: 9, kind: output, shape index: {2}]
  %10 = xla_tuple %s7, %s8, %s9
  %s11 = sld [smem:[#allocation0]]
  $region66: #{clip_attention_forward.3} parent=0
    _
  %s13 = ssub.s32 1, %s11
  %s14 = scalar_select 0, %s13, %s11
  $region1: #{clip_attention_forward.3} parent=0
    #allocation2 [shape = 'u8[8192]{0}', space=vmem, size = 0x2000, scoped, tag = 'input window, operand 1, single buffered']
    #allocation3 [shape = 's32[1]{0}', space=sflag, size = 0x4, scoped, tag = 'scoped memory for clip_attention_forward.3']
    #allocation4 [shape = 'u8[8192]{0}', space=vmem, size = 0x2000, scoped, tag = 'input window, operand 3, single buffered']
    #allocation5 [shape = 's32[1]{0}', space=sflag, size = 0x4, scoped, tag = 'scoped memory for clip_attention_forward.3']
    #allocation6 [shape = 'u8[8192]{0}', space=vmem, size = 0x2000, scoped, tag = 'input window, operand 5, single buffered']
    %15 = vsyncpa [#allocation3], 0
    %16 = vsyncpa [#allocation5], 0
    // Predicated region
    $region2: #{clip_attention_forward.3} parent=1 // pred_check
      _
    $region3: #{clip_attention_forward.3} parent=1 // pred_check_branch
      %18 = sbr.rel (0) target = $region5
    $region4: #{clip_attention_forward.3} parent=1 // pred_region
      _
    $region5: #{clip_attention_forward.3} parent=1 // pred_fallthru
      _
    // Predicated region
    $region6: #{clip_attention_forward.3} parent=1 // pred_check
      _
    $region7: #{clip_attention_forward.3} parent=1 // pred_check_branch
      %20 = sbr.rel (0) target = $region9
    $region8: #{clip_attention_forward.3} parent=1 // pred_region
      %s22 = ssub.s32 256, 256
      %23 = vsyncadd [#allocation3], %s22
      %s24 = sshll.u32 [#allocation2], 4
      %s25 = int_to_ptr.vmem [resolvable:$true] %s24
      %30 = dma.hbm_to_vmem [thread:$0]  %s1, 256, %s25, [#allocation3], 64, 64, 4
    $region9: #{clip_attention_forward.3} parent=1 // pred_fallthru
      _
    // Predicated region
    $region10: #{clip_attention_forward.3} parent=1 // pred_check
      _
    $region11: #{clip_attention_forward.3} parent=1 // pred_check_branch
      %32 = sbr.rel (0) target = $region13
    $region12: #{clip_attention_forward.3} parent=1 // pred_region
      _
    $region13: #{clip_attention_forward.3} parent=1 // pred_fallthru
      _
    // Predicated region
    $region14: #{clip_attention_forward.3} parent=1 // pred_check
      _
    $region15: #{clip_attention_forward.3} parent=1 // pred_check_branch
      %34 = sbr.rel (0) target = $region17
    $region16: #{clip_attention_forward.3} parent=1 // pred_region
      %s36 = ssub.s32 256, 256
      %37 = vsyncadd [#allocation5], %s36
      %s38 = sshll.u32 [#allocation4], 4
      %s39 = int_to_ptr.vmem [resolvable:$true] %s38
      %44 = dma.hbm_to_vmem [thread:$0]  %s3, 256, %s39, [#allocation5], 64, 64, 4
    $region17: #{clip_attention_forward.3} parent=1 // pred_fallthru
      _
    // Predicated region
    $region18: #{clip_attention_forward.3} parent=1 // pred_check
      _
    $region19: #{clip_attention_forward.3} parent=1 // pred_check_branch
      %46 = sbr.rel (0) target = $region21
    $region20: #{clip_attention_forward.3} parent=1 // pred_region
      _
    $region21: #{clip_attention_forward.3} parent=1 // pred_fallthru
      _
    // Predicated region
    $region22: #{clip_attention_forward.3} parent=1 // pred_check
      _
    $region23: #{clip_attention_forward.3} parent=1 // pred_check_branch
      %48 = sbr.rel (0) target = $region25
    $region24: #{clip_attention_forward.3} parent=1 // pred_region
      %s50 = ssub.s32 256, 256
      %51 = vsyncadd [#allocation5], %s50
      %s52 = sshll.u32 [#allocation6], 4
      %s53 = int_to_ptr.vmem [resolvable:$true] %s52
      %58 = dma.hbm_to_vmem [thread:$0]  %s5, 256, %s53, [#allocation5], 64, 64, 4
    $region25: #{clip_attention_forward.3} parent=1 // pred_fallthru
      _
    // Predicated region
    $region26: #{clip_attention_forward.3} parent=1 // pred_check
      _
    $region27: #{clip_attention_forward.3} parent=1 // pred_check_branch
      %60 = sbr.rel (0) target = $region29
    $region28: #{clip_attention_forward.3} parent=1 // pred_region
      _
    $region29: #{clip_attention_forward.3} parent=1 // pred_fallthru
      _
    // Predicated region
    $region30: #{clip_attention_forward.3} parent=1 // pred_check
      _
    $region31: #{clip_attention_forward.3} parent=1 // pred_check_branch
      %62 = sbr.rel (0) target = $region33
    $region32: #{clip_attention_forward.3} parent=1 // pred_region
      %63 = dma.done [#allocation3], 256
    $region33: #{clip_attention_forward.3} parent=1 // pred_fallthru
      _
    // Predicated region
    $region34: #{clip_attention_forward.3} parent=1 // pred_check
      _
    $region35: #{clip_attention_forward.3} parent=1 // pred_check_branch
      %65 = sbr.rel (0) target = $region37
    $region36: #{clip_attention_forward.3} parent=1 // pred_region
      %66 = dma.done [#allocation5], 256
    $region37: #{clip_attention_forward.3} parent=1 // pred_fallthru
      _
    // Predicated region
    $region38: #{clip_attention_forward.3} parent=1 // pred_check
      _
    $region39: #{clip_attention_forward.3} parent=1 // pred_check_branch
      %68 = sbr.rel (0) target = $region41
    $region40: #{clip_attention_forward.3} parent=1 // pred_region
      %69 = dma.done [#allocation5], 256
    $region41: #{clip_attention_forward.3} parent=1 // pred_fallthru
      _
    %v71 = vld [vmem:[%s0] sm:$0xff]
    %v72 = vld [vmem:[%s0 + $0x8] sm:$0xff]
    %v73 = vpack.c.bf16 %v72, %v71
    %v74 = vld [vmem:[#allocation2] sm:$0xf]
    %v75 = vld [vmem:[#allocation2 + $0x4] sm:$0xf]
    %v76 = vld [vmem:[#allocation2 + $0x8] sm:$0xf]
    %v77 = vld [vmem:[#allocation2 + $0xc] sm:$0xf]
    %v78 = vld [vmem:[%s2] sm:$0x1]
    %v80 = vlaneseq
    %v81 = vshrl.u32 %v80, 7
    %v82 = vsub.s32 0, %v81
    %v83 = vrot.slane %v78, %v82
    %v89 = vunpack.c.l.b16 %v74
    %v90 = vunpack.c.l.b16 %v75
    %v91 = vunpack.c.l.b16 %v76
    %v92 = vunpack.c.l.b16 %v77
    %v93 = vpack.c.b16 %v90, %v89
    %v94 = vpack.c.b16 %v92, %v91
    %vm97 = vcmask 261120
    %v99 = vsel %vm97, %v73, 0
    %101 = vmatprep.subr.bf16.mxu0 0
    %102 = vmatpush1.bf16.msra.mxu0 %v93
    %103 = vmatprep.subr.bf16.mxu0 0
    %104 = vmatpush1.bf16.msra.mxu0 %v94
    %105 = vmatprep.subr.bf16.mxu0 0
    %106 = vmatpush1.bf16.msra.mxu0 0
    %107 = vmatprep.subr.bf16.mxu0 0
    %108 = vmatpush1.bf16.msra.mxu0 0
    %109 = vmatprep.subr.bf16.mxu0 0
    %110 = vmatpush1.bf16.msra.mxu0 0
    %111 = vmatprep.subr.bf16.mxu0 0
    %112 = vmatpush1.bf16.msra.mxu0 0
    %113 = vmatprep.subr.bf16.mxu0 0
    %114 = vmatpush1.bf16.msra.mxu0 0
    %115 = vmatprep.subr.bf16.mxu0 0
    %116 = vmatpush1.bf16.msra.mxu0 0
    %117 = vmatprep.subr.bf16.mxu0 0
    %118 = vmatpush1.bf16.msra.mxu0 0
    %119 = vmatprep.subr.bf16.mxu0 0
    %120 = vmatpush1.bf16.msra.mxu0 0
    %121 = vmatprep.subr.bf16.mxu0 0
    %122 = vmatpush1.bf16.msra.mxu0 0
    %123 = vmatprep.subr.bf16.mxu0 0
    %124 = vmatpush1.bf16.msra.mxu0 0
    %125 = vmatprep.subr.bf16.mxu0 0
    %126 = vmatpush1.bf16.msra.mxu0 0
    %127 = vmatprep.subr.bf16.mxu0 0
    %128 = vmatpush1.bf16.msra.mxu0 0
    %129 = vmatprep.subr.bf16.mxu0 0
    %130 = vmatpush1.bf16.msra.mxu0 0
    %131 = vmatprep.subr.bf16.mxu0 0
    %132 = vmatpush1.bf16.msra.mxu0 0
    %133 = vmatprep.mubr.bf16.mxu0 0
    %134 = vmatmul.mubr.bf16.gmra.mrb[0].mxu0 %v99
    %v135 = vpop.f32.mrb[0].mxu0
    %v136 = vadd.f32 %v83, %v135
    %v137 = vpop.f32.mrb[0].mxu0
    %v138 = vpop.f32.mrb[0].mxu0
    %v139 = vadd.f32 %v83, %v138
    %v140 = vpop.f32.mrb[0].mxu0
    %141 = vdwg.mxu0
    %v142 = vld [vmem:[#allocation4] sm:$0xf]
    %v143 = vld [vmem:[#allocation4 + $0x4] sm:$0xf]
    %v144 = vld [vmem:[#allocation4 + $0x8] sm:$0xf]
    %v145 = vld [vmem:[#allocation4 + $0xc] sm:$0xf]
    %v146 = vld [vmem:[%s4] sm:$0x1]
    %v148 = vlaneseq
    %v149 = vshrl.u32 %v148, 7
    %v150 = vsub.s32 0, %v149
    %v151 = vrot.slane %v146, %v150
    %v157 = vunpack.c.l.b16 %v142
    %v158 = vunpack.c.l.b16 %v143
    %v159 = vunpack.c.l.b16 %v144
    %v160 = vunpack.c.l.b16 %v145
    %v161 = vpack.c.b16 %v158, %v157
    %v162 = vpack.c.b16 %v160, %v159
    %165 = vmatprep.subr.bf16.mxu0 0
    %166 = vmatpush1.bf16.msra.mxu0 %v161
    %167 = vmatprep.subr.bf16.mxu0 0
    %168 = vmatpush1.bf16.msra.mxu0 %v162
    %169 = vmatprep.subr.bf16.mxu0 0
    %170 = vmatpush1.bf16.msra.mxu0 0
    %171 = vmatprep.subr.bf16.mxu0 0
    %172 = vmatpush1.bf16.msra.mxu0 0
    %173 = vmatprep.subr.bf16.mxu0 0
    %174 = vmatpush1.bf16.msra.mxu0 0
    %175 = vmatprep.subr.bf16.mxu0 0
    %176 = vmatpush1.bf16.msra.mxu0 0
    %177 = vmatprep.subr.bf16.mxu0 0
    %178 = vmatpush1.bf16.msra.mxu0 0
    %179 = vmatprep.subr.bf16.mxu0 0
    %180 = vmatpush1.bf16.msra.mxu0 0
    %181 = vmatprep.subr.bf16.mxu0 0
    %182 = vmatpush1.bf16.msra.mxu0 0
    %183 = vmatprep.subr.bf16.mxu0 0
    %184 = vmatpush1.bf16.msra.mxu0 0
    %185 = vmatprep.subr.bf16.mxu0 0
    %186 = vmatpush1.bf16.msra.mxu0 0
    %187 = vmatprep.subr.bf16.mxu0 0
    %188 = vmatpush1.bf16.msra.mxu0 0
    %189 = vmatprep.subr.bf16.mxu0 0
    %190 = vmatpush1.bf16.msra.mxu0 0
    %191 = vmatprep.subr.bf16.mxu0 0
    %192 = vmatpush1.bf16.msra.mxu0 0
    %193 = vmatprep.subr.bf16.mxu0 0
    %194 = vmatpush1.bf16.msra.mxu0 0
    %195 = vmatprep.subr.bf16.mxu0 0
    %196 = vmatpush1.bf16.msra.mxu0 0
    %197 = vmatprep.mubr.bf16.mxu0 0
    %198 = vmatmul.mubr.bf16.gmra.mrb[0].mxu0 %v99
    %v199 = vpop.f32.mrb[0].mxu0
    %v200 = vadd.f32 %v151, %v199
    %v201 = vpop.f32.mrb[0].mxu0
    %v202 = vpop.f32.mrb[0].mxu0
    %v203 = vadd.f32 %v151, %v202
    %v204 = vpop.f32.mrb[0].mxu0
    %205 = vdwg.mxu0
    %v206 = vld [vmem:[#allocation6] sm:$0xf]
    %v207 = vld [vmem:[#allocation6 + $0x4] sm:$0xf]
    %v208 = vld [vmem:[#allocation6 + $0x8] sm:$0xf]
    %v209 = vld [vmem:[#allocation6 + $0xc] sm:$0xf]
    %v210 = vld [vmem:[%s6] sm:$0x1]
    %v212 = vlaneseq
    %v213 = vshrl.u32 %v212, 7
    %v214 = vsub.s32 0, %v213
    %v215 = vrot.slane %v210, %v214
    %v221 = vunpack.c.l.b16 %v206
    %v222 = vunpack.c.l.b16 %v207
    %v223 = vunpack.c.l.b16 %v208
    %v224 = vunpack.c.l.b16 %v209
    %v225 = vpack.c.b16 %v222, %v221
    %v226 = vpack.c.b16 %v224, %v223
    %229 = vmatprep.subr.bf16.mxu0 0
    %230 = vmatpush1.bf16.msra.mxu0 %v225
    %231 = vmatprep.subr.bf16.mxu0 0
    %232 = vmatpush1.bf16.msra.mxu0 %v226
    %233 = vmatprep.subr.bf16.mxu0 0
    %234 = vmatpush1.bf16.msra.mxu0 0
    %235 = vmatprep.subr.bf16.mxu0 0
    %236 = vmatpush1.bf16.msra.mxu0 0
    %237 = vmatprep.subr.bf16.mxu0 0
    %238 = vmatpush1.bf16.msra.mxu0 0
    %239 = vmatprep.subr.bf16.mxu0 0
    %240 = vmatpush1.bf16.msra.mxu0 0
    %241 = vmatprep.subr.bf16.mxu0 0
    %242 = vmatpush1.bf16.msra.mxu0 0
    %243 = vmatprep.subr.bf16.mxu0 0
    %244 = vmatpush1.bf16.msra.mxu0 0
    %245 = vmatprep.subr.bf16.mxu0 0
    %246 = vmatpush1.bf16.msra.mxu0 0
    %247 = vmatprep.subr.bf16.mxu0 0
    %248 = vmatpush1.bf16.msra.mxu0 0
    %249 = vmatprep.subr.bf16.mxu0 0
    %250 = vmatpush1.bf16.msra.mxu0 0
    %251 = vmatprep.subr.bf16.mxu0 0
    %252 = vmatpush1.bf16.msra.mxu0 0
    %253 = vmatprep.subr.bf16.mxu0 0
    %254 = vmatpush1.bf16.msra.mxu0 0
    %255 = vmatprep.subr.bf16.mxu0 0
    %256 = vmatpush1.bf16.msra.mxu0 0
    %257 = vmatprep.subr.bf16.mxu0 0
    %258 = vmatpush1.bf16.msra.mxu0 0
    %259 = vmatprep.subr.bf16.mxu0 0
    %260 = vmatpush1.bf16.msra.mxu0 0
    %261 = vmatprep.mubr.bf16.mxu0 0
    %262 = vmatmul.mubr.bf16.gmra.mrb[0].mxu0 %v99
    %v263 = vpop.f32.mrb[0].mxu0
    %v264 = vadd.f32 %v215, %v263
    %v265 = vpop.f32.mrb[0].mxu0
    %v266 = vpop.f32.mrb[0].mxu0
    %v267 = vadd.f32 %v215, %v266
    %v268 = vpop.f32.mrb[0].mxu0
    %269 = vdwg.mxu0
    %v270 = vpack.c.bf16 %v139, %v136
    %v272 = vunpack.c.l.b16 %v270
    %v273 = vunpack.c.h.b16 %v270
    %v274 = vpack.c.b16 %v272, %v272
    %v275 = vpack.c.b16 %v273, %v273
    %vm278 = vcmask 257024
    %279 = vst.msk [vmem:[%s7] sm:$0xf] %vm278, %v274
    %280 = vst.msk [vmem:[%s7 + $0x4] sm:$0xf] %vm278, %v275
    %v281 = vpack.c.bf16 %v203, %v200
    %v283 = vunpack.c.l.b16 %v281
    %v284 = vunpack.c.h.b16 %v281
    %v285 = vpack.c.b16 %v283, %v283
    %v286 = vpack.c.b16 %v284, %v284
    %289 = vst.msk [vmem:[%s8] sm:$0xf] %vm278, %v285
    %290 = vst.msk [vmem:[%s8 + $0x4] sm:$0xf] %vm278, %v286
    %v291 = vpack.c.bf16 %v267, %v264
    %v293 = vunpack.c.l.b16 %v291
    %v294 = vunpack.c.h.b16 %v291
    %v295 = vpack.c.b16 %v293, %v293
    %v296 = vpack.c.b16 %v294, %v294
    %299 = vst.msk [vmem:[%s9] sm:$0xf] %vm278, %v295
    %300 = vst.msk [vmem:[%s9 + $0x4] sm:$0xf] %vm278, %v296
    // Predicated region
    $region42: #{clip_attention_forward.3} parent=1 // pred_check
      _
    $region43: #{clip_attention_forward.3} parent=1 // pred_check_branch
      %302 = sbr.rel (0) target = $region45
    $region44: #{clip_attention_forward.3} parent=1 // pred_region
      _
    $region45: #{clip_attention_forward.3} parent=1 // pred_fallthru
      _
    // Predicated region
    $region46: #{clip_attention_forward.3} parent=1 // pred_check
      _
    $region47: #{clip_attention_forward.3} parent=1 // pred_check_branch
      %304 = sbr.rel (0) target = $region49
    $region48: #{clip_attention_forward.3} parent=1 // pred_region
      _
    $region49: #{clip_attention_forward.3} parent=1 // pred_fallthru
      _
    // Predicated region
    $region50: #{clip_attention_forward.3} parent=1 // pred_check
      _
    $region51: #{clip_attention_forward.3} parent=1 // pred_check_branch
      %306 = sbr.rel (0) target = $region53
    $region52: #{clip_attention_forward.3} parent=1 // pred_region
      _
    $region53: #{clip_attention_forward.3} parent=1 // pred_fallthru
      _
    // Predicated region
    $region54: #{clip_attention_forward.3} parent=1 // pred_check
      _
    $region55: #{clip_attention_forward.3} parent=1 // pred_check_branch
      %308 = sbr.rel (0) target = $region57
    $region56: #{clip_attention_forward.3} parent=1 // pred_region
      _
    $region57: #{clip_attention_forward.3} parent=1 // pred_fallthru
      _
    // Predicated region
    $region58: #{clip_attention_forward.3} parent=1 // pred_check
      _
    $region59: #{clip_attention_forward.3} parent=1 // pred_check_branch
      %310 = sbr.rel (0) target = $region61
    $region60: #{clip_attention_forward.3} parent=1 // pred_region
      _
    $region61: #{clip_attention_forward.3} parent=1 // pred_fallthru
      _
    // Predicated region
    $region62: #{clip_attention_forward.3} parent=1 // pred_check
      _
    $region63: #{clip_attention_forward.3} parent=1 // pred_check_branch
      %312 = sbr.rel (0) target = $region65
    $region64: #{clip_attention_forward.3} parent=1 // pred_region
      _
    $region65: #{clip_attention_forward.3} parent=1 // pred_fallthru
      _
    %313 = vsyncpa [#allocation3], 1
    %314 = vsyncpa [#allocation5], 1

// kernel: clip_attention_forward.4
$region0: #{clip_attention_forward.4}
  #allocation0 [shape = 'u32[]', space=smem, size = 0x4, offset = 0x4, fixed_abs, tag = 'smem constant byte address 0x4 - core index']
  #allocation1 [shape = 'u32[144,128]{1,0:T(1,128)}', space=vmem, size = 0x12000, scoped, tag = 'internal scratch']
  %s0 = inlined_call_operand.vmem [shape: bf16[2,8,32], index: 0, kind: input, shape index: {}]
  %s1 = inlined_call_operand.vmem [shape: bf16[2,8,32], index: 1, kind: input, shape index: {}]
  %s2 = inlined_call_operand.vmem [shape: bf16[2,8,32], index: 2, kind: input, shape index: {}]
  %s3 = inlined_call_operand.vmem [shape: bf16[2,8,32], index: 3, kind: output, shape index: {}]
  %s4 = sld [smem:[#allocation0]]
  $region45: #{clip_attention_forward.4} parent=0
    _
  %s6 = ssub.s32 1, %s4
  %s7 = scalar_select 0, %s6, %s4
  loop: start=0, step=1, limit=4
  $region2: #{clip_attention_forward.4} parent=0 // loop_pre_header
    _
  $region3: #{clip_attention_forward.4} parent=0 // loop_header
    %s9 = sphi 0, %s13
    %p10 = scmp.ge.s32.totalorder %s9, 4
    %s16 = sphi 0, %s28
    %s17 = sphi 0, %s24
    %s18 = sphi 0, %s16
    %s19 = sphi 0, %s17
    %s20 = sphi 0, %s18
    %s21 = sphi 0, %s19
    %s33 = sphi 0, %s35
    %s36 = sphi 0, %s33
    %s37 = sphi 0, %s36
    %s53 = sphi 0, %s37
    %s61 = sphi 0, %s63
    %s64 = sphi 0, %s61
    %s65 = sphi 0, %s64
    %s81 = sphi 0, %s65
    %s89 = sphi 0, %s91
    %s92 = sphi 0, %s89
    %s93 = sphi 0, %s92
    %s109 = sphi 0, %s93
    %s117 = sphi 0, %s119
    %s120 = sphi 0, %s117
    %s121 = sphi 0, %s120
    %s137 = sphi 0, %s121
  $region4: #{clip_attention_forward.4} parent=0 // loop_header_branch
    %12 = sbr.rel (%p10) target = $region8
  $region5: #{clip_attention_forward.4} parent=0 // loop_body
    %s14 = ssub.s32 %s9, 1
    %s15 = ssub.s32 %s9, 2
    %s22 = sadd.s32 1, %s17
    %p23 = scmp.ge.s32.totalorder %s22, 1
    %s24 = scalar_select %p23, 0, %s22
    %s25 = sadd.s32 1, %s16
    %s26 = scalar_select %p23, %s25, %s16
    %p27 = scmp.ge.s32.totalorder %s26, 2
    %s28 = scalar_select %p27, 0, %s26
    %s29 = ssub.s32 %s16, %s28
    %s30 = ssub.s32 %s17, %s24
    %s31 = sor.u32 %s29, %s30
    %p32 = scmp.eq.s32.totalorder %s31, 0
    %s34 = sadd.s32 %s33, 1
    %s35 = scalar_select %p32, %s33, %s34
    %p38 = pneg %p32
    %p39 = scmp.eq.s32.totalorder %s9, 1
    %p40 = por %p38, %p39
    %p41 = scmp.ne.s32.totalorder %s33, %s36
    %p42 = scmp.eq.s32.totalorder %s9, 0
    %p43 = por %p41, %p42
    %p44 = scmp.ne.s32.totalorder %s33, %s36
    %p45 = scmp.eq.s32.totalorder %s14, 1
    %p46 = por %p44, %p45
    %p47 = scmp.ne.s32.totalorder %s36, %s37
    %p48 = scmp.eq.s32.totalorder %s14, 0
    %p49 = por %p47, %p48
    %p50 = scmp.ne.s32.totalorder %s36, %s37
    %p51 = scmp.eq.s32.totalorder %s15, 1
    %p52 = por %p50, %p51
    %p54 = scmp.ne.s32.totalorder %s37, %s53
    %p55 = scmp.eq.s32.totalorder %s15, 0
    %p56 = por %p54, %p55
    %s57 = ssub.s32 %s16, %s28
    %s58 = ssub.s32 %s17, %s24
    %s59 = sor.u32 %s57, %s58
    %p60 = scmp.eq.s32.totalorder %s59, 0
    %s62 = sadd.s32 %s61, 1
    %s63 = scalar_select %p60, %s61, %s62
    %p66 = pneg %p60
    %p67 = scmp.eq.s32.totalorder %s9, 1
    %p68 = por %p66, %p67
    %p69 = scmp.ne.s32.totalorder %s61, %s64
    %p70 = scmp.eq.s32.totalorder %s9, 0
    %p71 = por %p69, %p70
    %p72 = scmp.ne.s32.totalorder %s61, %s64
    %p73 = scmp.eq.s32.totalorder %s14, 1
    %p74 = por %p72, %p73
    %p75 = scmp.ne.s32.totalorder %s64, %s65
    %p76 = scmp.eq.s32.totalorder %s14, 0
    %p77 = por %p75, %p76
    %p78 = scmp.ne.s32.totalorder %s64, %s65
    %p79 = scmp.eq.s32.totalorder %s15, 1
    %p80 = por %p78, %p79
    %p82 = scmp.ne.s32.totalorder %s65, %s81
    %p83 = scmp.eq.s32.totalorder %s15, 0
    %p84 = por %p82, %p83
    %s85 = ssub.s32 %s16, %s28
    %s86 = ssub.s32 %s17, %s24
    %s87 = sor.u32 %s85, %s86
    %p88 = scmp.eq.s32.totalorder %s87, 0
    %s90 = sadd.s32 %s89, 1
    %s91 = scalar_select %p88, %s89, %s90
    %p94 = pneg %p88
    %p95 = scmp.eq.s32.totalorder %s9, 1
    %p96 = por %p94, %p95
    %p97 = scmp.ne.s32.totalorder %s89, %s92
    %p98 = scmp.eq.s32.totalorder %s9, 0
    %p99 = por %p97, %p98
    %p100 = scmp.ne.s32.totalorder %s89, %s92
    %p101 = scmp.eq.s32.totalorder %s14, 1
    %p102 = por %p100, %p101
    %p103 = scmp.ne.s32.totalorder %s92, %s93
    %p104 = scmp.eq.s32.totalorder %s14, 0
    %p105 = por %p103, %p104
    %p106 = scmp.ne.s32.totalorder %s92, %s93
    %p107 = scmp.eq.s32.totalorder %s15, 1
    %p108 = por %p106, %p107
    %p110 = scmp.ne.s32.totalorder %s93, %s109
    %p111 = scmp.eq.s32.totalorder %s15, 0
    %p112 = por %p110, %p111
    %s113 = ssub.s32 %s16, %s28
    %s114 = ssub.s32 %s17, %s24
    %s115 = sor.u32 %s113, %s114
    %p116 = scmp.eq.s32.totalorder %s115, 0
    %s118 = sadd.s32 %s117, 1
    %s119 = scalar_select %p116, %s117, %s118
    %p122 = pneg %p116
    %p123 = scmp.eq.s32.totalorder %s9, 1
    %p124 = por %p122, %p123
    %p125 = scmp.ne.s32.totalorder %s117, %s120
    %p126 = scmp.eq.s32.totalorder %s9, 0
    %p127 = por %p125, %p126
    %p128 = scmp.ne.s32.totalorder %s117, %s120
    %p129 = scmp.eq.s32.totalorder %s14, 1
    %p130 = por %p128, %p129
    %p131 = scmp.ne.s32.totalorder %s120, %s121
    %p132 = scmp.eq.s32.totalorder %s14, 0
    %p133 = por %p131, %p132
    %p134 = scmp.ne.s32.totalorder %s120, %s121
    %p135 = scmp.eq.s32.totalorder %s15, 1
    %p136 = por %p134, %p135
    %p138 = scmp.ne.s32.totalorder %s121, %s137
    %p139 = scmp.eq.s32.totalorder %s15, 0
    %p140 = por %p138, %p139
    %p141 = scmp.le.s32.totalorder 1, %s9
    %p142 = scmp.lt.s32.totalorder %s9, 3
    %p143 = pnand %p141, %p142
    %p144 = pneg %p143
    // Predicated region
    $region9: #{clip_attention_forward.4} parent=5 // pred_check
      _
    $region10: #{clip_attention_forward.4} parent=5 // pred_check_branch
      %146 = sbr.rel (%p143) target = $region12
    $region11: #{clip_attention_forward.4} parent=5 // pred_region
      %s147 = ssub.s32 %s9, 1
    $region12: #{clip_attention_forward.4} parent=5 // pred_fallthru
      _
    %p148 = scmp.lt.s32.totalorder %s9, 2
    // Predicated region
    $region13: #{clip_attention_forward.4} parent=5 // pred_check
      %p149 = pneg %p148
    $region14: #{clip_attention_forward.4} parent=5 // pred_check_branch
      %151 = sbr.rel (%p149) target = $region16
    $region15: #{clip_attention_forward.4} parent=5 // pred_region
      // Predicated region
      $region17: #{clip_attention_forward.4} parent=15 // pred_check
        %p152 = pneg %p43
      $region18: #{clip_attention_forward.4} parent=15 // pred_check_branch
        %154 = sbr.rel (%p152) target = $region20
      $region19: #{clip_attention_forward.4} parent=15 // pred_region
        %p155 = scmp.lt.s32.totalorder %s16, 1
        %s156 = scalar_select %p155, %s16, 1
        %p157 = scmp.lt.s32.totalorder %s17, 0
        %s158 = scalar_select %p157, %s17, 0
        %s159 = sadd.s32 %s158, %s156
        %s160 = smul.addr %s159, 4
        %s161 = scalar_lea.vmem %s0, %s160
      $region20: #{clip_attention_forward.4} parent=15 // pred_fallthru
        _
      // Predicated region
      $region21: #{clip_attention_forward.4} parent=15 // pred_check
        %p162 = pneg %p71
      $region22: #{clip_attention_forward.4} parent=15 // pred_check_branch
        %164 = sbr.rel (%p162) target = $region24
      $region23: #{clip_attention_forward.4} parent=15 // pred_region
        %p165 = scmp.lt.s32.totalorder %s16, 1
        %s166 = scalar_select %p165, %s16, 1
        %p167 = scmp.lt.s32.totalorder %s17, 0
        %s168 = scalar_select %p167, %s17, 0
        %s169 = sadd.s32 %s168, %s166
        %s170 = smul.addr %s169, 4
        %s171 = scalar_lea.vmem %s1, %s170
      $region24: #{clip_attention_forward.4} parent=15 // pred_fallthru
        _
      // Predicated region
      $region25: #{clip_attention_forward.4} parent=15 // pred_check
        %p172 = pneg %p99
      $region26: #{clip_attention_forward.4} parent=15 // pred_check_branch
        %174 = sbr.rel (%p172) target = $region28
      $region27: #{clip_attention_forward.4} parent=15 // pred_region
        %p175 = scmp.lt.s32.totalorder %s16, 1
        %s176 = scalar_select %p175, %s16, 1
        %p177 = scmp.lt.s32.totalorder %s17, 0
        %s178 = scalar_select %p177, %s17, 0
        %s179 = sadd.s32 %s178, %s176
        %s180 = smul.addr %s179, 4
        %s181 = scalar_lea.vmem %s2, %s180
      $region28: #{clip_attention_forward.4} parent=15 // pred_fallthru
        _
    $region16: #{clip_attention_forward.4} parent=5 // pred_fallthru
      _
    %p182 = scmp.le.s32.totalorder 1, %s9
    %p183 = scmp.lt.s32.totalorder %s9, 3
    %p184 = pnand %p182, %p183
    %p185 = pneg %p184
    // Predicated region
    $region29: #{clip_attention_forward.4} parent=5 // pred_check
      _
    $region30: #{clip_attention_forward.4} parent=5 // pred_check_branch
      %187 = sbr.rel (%p184) target = $region32
    $region31: #{clip_attention_forward.4} parent=5 // pred_region
      %s188 = ssub.s32 %s9, 1
      %p189 = scmp.lt.s32.totalorder %s18, 1
      %s190 = scalar_select %p189, %s18, 1
      %p191 = scmp.lt.s32.totalorder %s19, 0
      %s192 = scalar_select %p191, %s19, 0
      %s193 = sadd.s32 %s192, %s190
      %s194 = smul.addr %s193, 4
      %s195 = scalar_lea.vmem %s0, %s194
      %p196 = pneg %p49
      %p197 = pneg %p46
      %p198 = scmp.lt.s32.totalorder %s18, 1
      %s199 = scalar_select %p198, %s18, 1
      %p200 = scmp.lt.s32.totalorder %s19, 0
      %s201 = scalar_select %p200, %s19, 0
      %s202 = sadd.s32 %s201, %s199
      %s203 = smul.addr %s202, 4
      %s204 = scalar_lea.vmem %s1, %s203
      %p205 = pneg %p77
      %p206 = pneg %p74
      %p207 = scmp.lt.s32.totalorder %s18, 1
      %s208 = scalar_select %p207, %s18, 1
      %p209 = scmp.lt.s32.totalorder %s19, 0
      %s210 = scalar_select %p209, %s19, 0
      %s211 = sadd.s32 %s210, %s208
      %s212 = smul.addr %s211, 4
      %s213 = scalar_lea.vmem %s2, %s212
      %p214 = pneg %p105
      %p215 = pneg %p102
      %p216 = pneg %p133
      %p217 = pneg %p130
      %p218 = scmp.lt.s32.totalorder %s18, 1
      %s219 = scalar_select %p218, %s18, 1
      %p220 = scmp.lt.s32.totalorder %s19, 0
      %s221 = scalar_select %p220, %s19, 0
      %s222 = sadd.s32 %s221, %s219
      %s223 = smul.addr %s222, 4
      %s224 = scalar_lea.vmem %s3, %s223
      %p225 = scmp.lt.s32.totalorder %s18, 1
      %s226 = scalar_select %p225, %s18, 1
      %p227 = scmp.lt.s32.totalorder %s19, 0
      %s228 = scalar_select %p227, %s19, 0
      %s229 = sadd.s32 %s228, %s226
      %s230 = smul.addr %s229, 4
      %s231 = scalar_lea.vmem %s0, %s230
      %p232 = scmp.lt.s32.totalorder %s18, 1
      %s233 = scalar_select %p232, %s18, 1
      %p234 = scmp.lt.s32.totalorder %s19, 0
      %s235 = scalar_select %p234, %s19, 0
      %s236 = sadd.s32 %s235, %s233
      %s237 = smul.addr %s236, 4
      %s238 = scalar_lea.vmem %s1, %s237
      %p239 = scmp.lt.s32.totalorder %s18, 1
      %s240 = scalar_select %p239, %s18, 1
      %p241 = scmp.lt.s32.totalorder %s19, 0
      %s242 = scalar_select %p241, %s19, 0
      %s243 = sadd.s32 %s242, %s240
      %s244 = smul.addr %s243, 4
      %s245 = scalar_lea.vmem %s2, %s244
      %p246 = scmp.lt.s32.totalorder %s18, 1
      %s247 = scalar_select %p246, %s18, 1
      %p248 = scmp.lt.s32.totalorder %s19, 0
      %s249 = scalar_select %p248, %s19, 0
      %s250 = sadd.s32 %s249, %s247
      %s251 = smul.addr %s250, 4
      %s252 = scalar_lea.vmem %s3, %s251
      %v254 = vld [vmem:[%s231] sm:$0xf]
      %v255 = vld [vmem:[%s238] sm:$0xf]
      %v256 = vld [vmem:[%s245] sm:$0xf]
      %vm257 = vcmask 64512
      %v259 = vsel %vm257, %v254, 0
      %v262 = vsel %vm257, %v255, 0
      %264 = vmatprep.subr.bf16.mxu0 0
      %265 = vmatpush1.bf16.xpose.msra.mxu0 %v262
      %266 = vmatprep.subr.bf16.mxu0 0
      %267 = vmatpush1.bf16.xpose.msra.mxu0 0
      %268 = vmatprep.subr.bf16.mxu0 0
      %269 = vmatpush1.bf16.xpose.msra.mxu0 0
      %270 = vmatprep.subr.bf16.mxu0 0
      %271 = vmatpush1.bf16.xpose.msra.mxu0 0
      %272 = vmatprep.subr.bf16.mxu0 0
      %273 = vmatpush1.bf16.xpose.msra.mxu0 0
      %274 = vmatprep.subr.bf16.mxu0 0
      %275 = vmatpush1.bf16.xpose.msra.mxu0 0
      %276 = vmatprep.subr.bf16.mxu0 0
      %277 = vmatpush1.bf16.xpose.msra.mxu0 0
      %278 = vmatprep.subr.bf16.mxu0 0
      %279 = vmatpush1.bf16.xpose.msra.mxu0 0
      %280 = vmatprep.subr.bf16.mxu0 0
      %281 = vmatpush1.bf16.xpose.msra.mxu0 0
      %282 = vmatprep.subr.bf16.mxu0 0
      %283 = vmatpush1.bf16.xpose.msra.mxu0 0
      %284 = vmatprep.subr.bf16.mxu0 0
      %285 = vmatpush1.bf16.xpose.msra.mxu0 0
      %286 = vmatprep.subr.bf16.mxu0 0
      %287 = vmatpush1.bf16.xpose.msra.mxu0 0
      %288 = vmatprep.subr.bf16.mxu0 0
      %289 = vmatpush1.bf16.xpose.msra.mxu0 0
      %290 = vmatprep.subr.bf16.mxu0 0
      %291 = vmatpush1.bf16.xpose.msra.mxu0 0
      %292 = vmatprep.subr.bf16.mxu0 0
      %293 = vmatpush1.bf16.xpose.msra.mxu0 0
      %294 = vmatprep.subr.bf16.mxu0 0
      %295 = vmatpush1.bf16.xpose.msra.mxu0 0
      %296 = vmatprep.mubr.bf16.mxu0 0
      %297 = vmatmul.mubr.bf16.gmra.mrb[0].mxu0 %v259
      %v298 = vpop.f32.mrb[0].mxu0
      %v299 = vadd.f32 0.0, %v298
      %v300 = vpop.f32.mrb[0].mxu0
      %v301 = vpop.f32.mrb[0].mxu0
      %v302 = vpop.f32.mrb[0].mxu0
      %303 = vdwg.mxu0
      %v304 = vsel %vm257, %v299, -inf
      %305 = vmax.xlane.f32.xlu0 %v304
      %v306 = vpop.xlane.xlu0 %305
      %v307 = vsub.f32 %v299, %v306
      %v308 = vmul.f32 %v307, 1.442695
      %v309 = vpow.pop %v308
      %v310 = vsel %vm257, %v309, 0.0
      %311 = vadd.xlane.f32.xlu0 %v310
      %v312 = vpop.xlane.xlu0 %311
      %v313 = vpack.c.bf16 %v309, %v309
      %v315 = vsel %vm257, %v313, 0
      %vm317 = vcmask 1043456
      %v319 = vsel %vm317, %v256, 0
      %321 = vmatprep.subr.bf16.mxu0 0
      %322 = vmatpush1.bf16.msra.mxu0 %v319
      %323 = vmatprep.subr.bf16.mxu0 0
      %324 = vmatpush1.bf16.msra.mxu0 0
      %325 = vmatprep.subr.bf16.mxu0 0
      %326 = vmatpush1.bf16.msra.mxu0 0
      %327 = vmatprep.subr.bf16.mxu0 0
      %328 = vmatpush1.bf16.msra.mxu0 0
      %329 = vmatprep.subr.bf16.mxu0 0
      %330 = vmatpush1.bf16.msra.mxu0 0
      %331 = vmatprep.subr.bf16.mxu0 0
      %332 = vmatpush1.bf16.msra.mxu0 0
      %333 = vmatprep.subr.bf16.mxu0 0
      %334 = vmatpush1.bf16.msra.mxu0 0
      %335 = vmatprep.subr.bf16.mxu0 0
      %336 = vmatpush1.bf16.msra.mxu0 0
      %337 = vmatprep.subr.bf16.mxu0 0
      %338 = vmatpush1.bf16.msra.mxu0 0
      %339 = vmatprep.subr.bf16.mxu0 0
      %340 = vmatpush1.bf16.msra.mxu0 0
      %341 = vmatprep.subr.bf16.mxu0 0
      %342 = vmatpush1.bf16.msra.mxu0 0
      %343 = vmatprep.subr.bf16.mxu0 0
      %344 = vmatpush1.bf16.msra.mxu0 0
      %345 = vmatprep.subr.bf16.mxu0 0
      %346 = vmatpush1.bf16.msra.mxu0 0
      %347 = vmatprep.subr.bf16.mxu0 0
      %348 = vmatpush1.bf16.msra.mxu0 0
      %349 = vmatprep.subr.bf16.mxu0 0
      %350 = vmatpush1.bf16.msra.mxu0 0
      %351 = vmatprep.subr.bf16.mxu0 0
      %352 = vmatpush1.bf16.msra.mxu0 0
      %353 = vmatprep.mubr.bf16.mxu0 0
      %354 = vmatmul.mubr.bf16.gmra.mrb[0].mxu0 %v315
      %v355 = vpop.f32.mrb[0].mxu0
      %v356 = vadd.f32 0.0, %v355
      %v357 = vpop.f32.mrb[0].mxu0
      %v358 = vpop.f32.mrb[0].mxu0
      %v359 = vpop.f32.mrb[0].mxu0
      %360 = vdwg.mxu0
      %v361 = vrcp.pop %v312
      %v362 = vmul.f32 %v356, %v361
      %v363 = vpack.c.bf16 %v362, %v362
      %vm364 = vcmask 60416
      %365 = vst.msk [vmem:[%s252] sm:$0xf] %vm364, %v363
      %v367 = vunpack.c.l.b16 %v254
      %v368 = vpack.c.b16 %v367, %v367
      %369 = vrot.lane.b32.xlu0 %v368, 120
      %v370 = vpop.permute.xlu0 %369
      %v372 = vunpack.c.l.b16 %v255
      %v373 = vpack.c.b16 %v372, %v372
      %374 = vrot.lane.b32.xlu0 %v373, 120
      %v375 = vpop.permute.xlu0 %374
      %v377 = vsel %vm257, %v370, 0
      %v380 = vsel %vm257, %v375, 0
      %382 = vmatprep.subr.bf16.mxu0 0
      %383 = vmatpush1.bf16.xpose.msra.mxu0 %v380
      %384 = vmatprep.subr.bf16.mxu0 0
      %385 = vmatpush1.bf16.xpose.msra.mxu0 0
      %386 = vmatprep.subr.bf16.mxu0 0
      %387 = vmatpush1.bf16.xpose.msra.mxu0 0
      %388 = vmatprep.subr.bf16.mxu0 0
      %389 = vmatpush1.bf16.xpose.msra.mxu0 0
      %390 = vmatprep.subr.bf16.mxu0 0
      %391 = vmatpush1.bf16.xpose.msra.mxu0 0
      %392 = vmatprep.subr.bf16.mxu0 0
      %393 = vmatpush1.bf16.xpose.msra.mxu0 0
      %394 = vmatprep.subr.bf16.mxu0 0
      %395 = vmatpush1.bf16.xpose.msra.mxu0 0
      %396 = vmatprep.subr.bf16.mxu0 0
      %397 = vmatpush1.bf16.xpose.msra.mxu0 0
      %398 = vmatprep.subr.bf16.mxu0 0
      %399 = vmatpush1.bf16.xpose.msra.mxu0 0
      %400 = vmatprep.subr.bf16.mxu0 0
      %401 = vmatpush1.bf16.xpose.msra.mxu0 0
      %402 = vmatprep.subr.bf16.mxu0 0
      %403 = vmatpush1.bf16.xpose.msra.mxu0 0
      %404 = vmatprep.subr.bf16.mxu0 0
      %405 = vmatpush1.bf16.xpose.msra.mxu0 0
      %406 = vmatprep.subr.bf16.mxu0 0
      %407 = vmatpush1.bf16.xpose.msra.mxu0 0
      %408 = vmatprep.subr.bf16.mxu0 0
      %409 = vmatpush1.bf16.xpose.msra.mxu0 0
      %410 = vmatprep.subr.bf16.mxu0 0
      %411 = vmatpush1.bf16.xpose.msra.mxu0 0
      %412 = vmatprep.subr.bf16.mxu0 0
      %413 = vmatpush1.bf16.xpose.msra.mxu0 0
      %414 = vmatprep.mubr.bf16.mxu0 0
      %415 = vmatmul.mubr.bf16.gmra.mrb[0].mxu0 %v377
      %v416 = vpop.f32.mrb[0].mxu0
      %v417 = vadd.f32 0.0, %v416
      %v418 = vpop.f32.mrb[0].mxu0
      %v419 = vpop.f32.mrb[0].mxu0
      %v420 = vpop.f32.mrb[0].mxu0
      %421 = vdwg.mxu0
      %v422 = vsel %vm257, %v417, -inf
      %423 = vmax.xlane.f32.xlu0 %v422
      %v424 = vpop.xlane.xlu0 %423
      %v425 = vsub.f32 %v417, %v424
      %v426 = vmul.f32 %v425, 1.442695
      %v427 = vpow.pop %v426
      %v428 = vsel %vm257, %v427, 0.0
      %429 = vadd.xlane.f32.xlu0 %v428
      %v430 = vpop.xlane.xlu0 %429
      %v431 = vpack.c.bf16 %v427, %v427
      %v433 = vunpack.c.l.b16 %v256
      %v434 = vpack.c.b16 %v433, %v433
      %435 = vrot.lane.b32.xlu0 %v434, 120
      %v436 = vpop.permute.xlu0 %435
      %v438 = vsel %vm257, %v431, 0
      %v441 = vsel %vm317, %v436, 0
      %443 = vmatprep.subr.bf16.mxu0 0
      %444 = vmatpush1.bf16.msra.mxu0 %v441
      %445 = vmatprep.subr.bf16.mxu0 0
      %446 = vmatpush1.bf16.msra.mxu0 0
      %447 = vmatprep.subr.bf16.mxu0 0
      %448 = vmatpush1.bf16.msra.mxu0 0
      %449 = vmatprep.subr.bf16.mxu0 0
      %450 = vmatpush1.bf16.msra.mxu0 0
      %451 = vmatprep.subr.bf16.mxu0 0
      %452 = vmatpush1.bf16.msra.mxu0 0
      %453 = vmatprep.subr.bf16.mxu0 0
      %454 = vmatpush1.bf16.msra.mxu0 0
      %455 = vmatprep.subr.bf16.mxu0 0
      %456 = vmatpush1.bf16.msra.mxu0 0
      %457 = vmatprep.subr.bf16.mxu0 0
      %458 = vmatpush1.bf16.msra.mxu0 0
      %459 = vmatprep.subr.bf16.mxu0 0
      %460 = vmatpush1.bf16.msra.mxu0 0
      %461 = vmatprep.subr.bf16.mxu0 0
      %462 = vmatpush1.bf16.msra.mxu0 0
      %463 = vmatprep.subr.bf16.mxu0 0
      %464 = vmatpush1.bf16.msra.mxu0 0
      %465 = vmatprep.subr.bf16.mxu0 0
      %466 = vmatpush1.bf16.msra.mxu0 0
      %467 = vmatprep.subr.bf16.mxu0 0
      %468 = vmatpush1.bf16.msra.mxu0 0
      %469 = vmatprep.subr.bf16.mxu0 0
      %470 = vmatpush1.bf16.msra.mxu0 0
      %471 = vmatprep.subr.bf16.mxu0 0
      %472 = vmatpush1.bf16.msra.mxu0 0
      %473 = vmatprep.subr.bf16.mxu0 0
      %474 = vmatpush1.bf16.msra.mxu0 0
      %475 = vmatprep.mubr.bf16.mxu0 0
      %476 = vmatmul.mubr.bf16.gmra.mrb[0].mxu0 %v438
      %v477 = vpop.f32.mrb[0].mxu0
      %v478 = vadd.f32 0.0, %v477
      %v479 = vpop.f32.mrb[0].mxu0
      %v480 = vpop.f32.mrb[0].mxu0
      %v481 = vpop.f32.mrb[0].mxu0
      %482 = vdwg.mxu0
      %v483 = vrcp.pop %v430
      %v484 = vmul.f32 %v478, %v483
      %v485 = vpack.c.bf16 %v484, %v484
      %v487 = vunpack.c.l.b16 %v485
      %v488 = vpack.c.b16 %v487, %v487
      %489 = vrot.lane.b32.xlu0 %v488, 8
      %v490 = vpop.permute.xlu0 %489
      %vm492 = vcmask 126016
      %493 = vst.msk [vmem:[%s252] sm:$0xf] %vm492, %v490
      %494 = vrot.lane.b32.xlu0 %v368, 112
      %v495 = vpop.permute.xlu0 %494
      %496 = vrot.lane.b32.xlu0 %v373, 112
      %v497 = vpop.permute.xlu0 %496
      %v499 = vsel %vm257, %v495, 0
      %v502 = vsel %vm257, %v497, 0
      %504 = vmatprep.subr.bf16.mxu0 0
      %505 = vmatpush1.bf16.xpose.msra.mxu0 %v502
      %506 = vmatprep.subr.bf16.mxu0 0
      %507 = vmatpush1.bf16.xpose.msra.mxu0 0
      %508 = vmatprep.subr.bf16.mxu0 0
      %509 = vmatpush1.bf16.xpose.msra.mxu0 0
      %510 = vmatprep.subr.bf16.mxu0 0
      %511 = vmatpush1.bf16.xpose.msra.mxu0 0
      %512 = vmatprep.subr.bf16.mxu0 0
      %513 = vmatpush1.bf16.xpose.msra.mxu0 0
      %514 = vmatprep.subr.bf16.mxu0 0
      %515 = vmatpush1.bf16.xpose.msra.mxu0 0
      %516 = vmatprep.subr.bf16.mxu0 0
      %517 = vmatpush1.bf16.xpose.msra.mxu0 0
      %518 = vmatprep.subr.bf16.mxu0 0
      %519 = vmatpush1.bf16.xpose.msra.mxu0 0
      %520 = vmatprep.subr.bf16.mxu0 0
      %521 = vmatpush1.bf16.xpose.msra.mxu0 0
      %522 = vmatprep.subr.bf16.mxu0 0
      %523 = vmatpush1.bf16.xpose.msra.mxu0 0
      %524 = vmatprep.subr.bf16.mxu0 0
      %525 = vmatpush1.bf16.xpose.msra.mxu0 0
      %526 = vmatprep.subr.bf16.mxu0 0
      %527 = vmatpush1.bf16.xpose.msra.mxu0 0
      %528 = vmatprep.subr.bf16.mxu0 0
      %529 = vmatpush1.bf16.xpose.msra.mxu0 0
      %530 = vmatprep.subr.bf16.mxu0 0
      %531 = vmatpush1.bf16.xpose.msra.mxu0 0
      %532 = vmatprep.subr.bf16.mxu0 0
      %533 = vmatpush1.bf16.xpose.msra.mxu0 0
      %534 = vmatprep.subr.bf16.mxu0 0
      %535 = vmatpush1.bf16.xpose.msra.mxu0 0
      %536 = vmatprep.mubr.bf16.mxu0 0
      %537 = vmatmul.mubr.bf16.gmra.mrb[0].mxu0 %v499
      %v538 = vpop.f32.mrb[0].mxu0
      %v539 = vadd.f32 0.0, %v538
      %v540 = vpop.f32.mrb[0].mxu0
      %v541 = vpop.f32.mrb[0].mxu0
      %v542 = vpop.f32.mrb[0].mxu0
      %543 = vdwg.mxu0
      %v544 = vsel %vm257, %v539, -inf
      %545 = vmax.xlane.f32.xlu0 %v544
      %v546 = vpop.xlane.xlu0 %545
      %v547 = vsub.f32 %v539, %v546
      %v548 = vmul.f32 %v547, 1.442695
      %v549 = vpow.pop %v548
      %v550 = vsel %vm257, %v549, 0.0
      %551 = vadd.xlane.f32.xlu0 %v550
      %v552 = vpop.xlane.xlu0 %551
      %v553 = vpack.c.bf16 %v549, %v549
      %554 = vrot.lane.b32.xlu0 %v434, 112
      %v555 = vpop.permute.xlu0 %554
      %v557 = vsel %vm257, %v553, 0
      %v560 = vsel %vm317, %v555, 0
      %562 = vmatprep.subr.bf16.mxu0 0
      %563 = vmatpush1.bf16.msra.mxu0 %v560
      %564 = vmatprep.subr.bf16.mxu0 0
      %565 = vmatpush1.bf16.msra.mxu0 0
      %566 = vmatprep.subr.bf16.mxu0 0
      %567 = vmatpush1.bf16.msra.mxu0 0
      %568 = vmatprep.subr.bf16.mxu0 0
      %569 = vmatpush1.bf16.msra.mxu0 0
      %570 = vmatprep.subr.bf16.mxu0 0
      %571 = vmatpush1.bf16.msra.mxu0 0
      %572 = vmatprep.subr.bf16.mxu0 0
      %573 = vmatpush1.bf16.msra.mxu0 0
      %574 = vmatprep.subr.bf16.mxu0 0
      %575 = vmatpush1.bf16.msra.mxu0 0
      %576 = vmatprep.subr.bf16.mxu0 0
      %577 = vmatpush1.bf16.msra.mxu0 0
      %578 = vmatprep.subr.bf16.mxu0 0
      %579 = vmatpush1.bf16.msra.mxu0 0
      %580 = vmatprep.subr.bf16.mxu0 0
      %581 = vmatpush1.bf16.msra.mxu0 0
      %582 = vmatprep.subr.bf16.mxu0 0
      %583 = vmatpush1.bf16.msra.mxu0 0
      %584 = vmatprep.subr.bf16.mxu0 0
      %585 = vmatpush1.bf16.msra.mxu0 0
      %586 = vmatprep.subr.bf16.mxu0 0
      %587 = vmatpush1.bf16.msra.mxu0 0
      %588 = vmatprep.subr.bf16.mxu0 0
      %589 = vmatpush1.bf16.msra.mxu0 0
      %590 = vmatprep.subr.bf16.mxu0 0
      %591 = vmatpush1.bf16.msra.mxu0 0
      %592 = vmatprep.subr.bf16.mxu0 0
      %593 = vmatpush1.bf16.msra.mxu0 0
      %594 = vmatprep.mubr.bf16.mxu0 0
      %595 = vmatmul.mubr.bf16.gmra.mrb[0].mxu0 %v557
      %v596 = vpop.f32.mrb[0].mxu0
      %v597 = vadd.f32 0.0, %v596
      %v598 = vpop.f32.mrb[0].mxu0
      %v599 = vpop.f32.mrb[0].mxu0
      %v600 = vpop.f32.mrb[0].mxu0
      %601 = vdwg.mxu0
      %v602 = vrcp.pop %v552
      %v603 = vmul.f32 %v597, %v602
      %v604 = vpack.c.bf16 %v603, %v603
      %v606 = vunpack.c.l.b16 %v604
      %v607 = vpack.c.b16 %v606, %v606
      %608 = vrot.lane.b32.xlu0 %v607, 16
      %v609 = vpop.permute.xlu0 %608
      %vm611 = vcmask 191616
      %612 = vst.msk [vmem:[%s252] sm:$0xf] %vm611, %v609
      %613 = vrot.lane.b32.xlu0 %v368, 104
      %v614 = vpop.permute.xlu0 %613
      %615 = vrot.lane.b32.xlu0 %v373, 104
      %v616 = vpop.permute.xlu0 %615
      %v618 = vsel %vm257, %v614, 0
      %v621 = vsel %vm257, %v616, 0
      %623 = vmatprep.subr.bf16.mxu0 0
      %624 = vmatpush1.bf16.xpose.msra.mxu0 %v621
      %625 = vmatprep.subr.bf16.mxu0 0
      %626 = vmatpush1.bf16.xpose.msra.mxu0 0
      %627 = vmatprep.subr.bf16.mxu0 0
      %628 = vmatpush1.bf16.xpose.msra.mxu0 0
      %629 = vmatprep.subr.bf16.mxu0 0
      %630 = vmatpush1.bf16.xpose.msra.mxu0 0
      %631 = vmatprep.subr.bf16.mxu0 0
      %632 = vmatpush1.bf16.xpose.msra.mxu0 0
      %633 = vmatprep.subr.bf16.mxu0 0
      %634 = vmatpush1.bf16.xpose.msra.mxu0 0
      %635 = vmatprep.subr.bf16.mxu0 0
      %636 = vmatpush1.bf16.xpose.msra.mxu0 0
      %637 = vmatprep.subr.bf16.mxu0 0
      %638 = vmatpush1.bf16.xpose.msra.mxu0 0
      %639 = vmatprep.subr.bf16.mxu0 0
      %640 = vmatpush1.bf16.xpose.msra.mxu0 0
      %641 = vmatprep.subr.bf16.mxu0 0
      %642 = vmatpush1.bf16.xpose.msra.mxu0 0
      %643 = vmatprep.subr.bf16.mxu0 0
      %644 = vmatpush1.bf16.xpose.msra.mxu0 0
      %645 = vmatprep.subr.bf16.mxu0 0
      %646 = vmatpush1.bf16.xpose.msra.mxu0 0
      %647 = vmatprep.subr.bf16.mxu0 0
      %648 = vmatpush1.bf16.xpose.msra.mxu0 0
      %649 = vmatprep.subr.bf16.mxu0 0
      %650 = vmatpush1.bf16.xpose.msra.mxu0 0
      %651 = vmatprep.subr.bf16.mxu0 0
      %652 = vmatpush1.bf16.xpose.msra.mxu0 0
      %653 = vmatprep.subr.bf16.mxu0 0
      %654 = vmatpush1.bf16.xpose.msra.mxu0 0
      %655 = vmatprep.mubr.bf16.mxu0 0
      %656 = vmatmul.mubr.bf16.gmra.mrb[0].mxu0 %v618
      %v657 = vpop.f32.mrb[0].mxu0
      %v658 = vadd.f32 0.0, %v657
      %v659 = vpop.f32.mrb[0].mxu0
      %v660 = vpop.f32.mrb[0].mxu0
      %v661 = vpop.f32.mrb[0].mxu0
      %662 = vdwg.mxu0
      %v663 = vsel %vm257, %v658, -inf
      %664 = vmax.xlane.f32.xlu0 %v663
      %v665 = vpop.xlane.xlu0 %664
      %v666 = vsub.f32 %v658, %v665
      %v667 = vmul.f32 %v666, 1.442695
      %v668 = vpow.pop %v667
      %v669 = vsel %vm257, %v668, 0.0
      %670 = vadd.xlane.f32.xlu0 %v669
      %v671 = vpop.xlane.xlu0 %670
      %v672 = vpack.c.bf16 %v668, %v668
      %673 = vrot.lane.b32.xlu0 %v434, 104
      %v674 = vpop.permute.xlu0 %673
      %v676 = vsel %vm257, %v672, 0
      %v679 = vsel %vm317, %v674, 0
      %681 = vmatprep.subr.bf16.mxu0 0
      %682 = vmatpush1.bf16.msra.mxu0 %v679
      %683 = vmatprep.subr.bf16.mxu0 0
      %684 = vmatpush1.bf16.msra.mxu0 0
      %685 = vmatprep.subr.bf16.mxu0 0
      %686 = vmatpush1.bf16.msra.mxu0 0
      %687 = vmatprep.subr.bf16.mxu0 0
      %688 = vmatpush1.bf16.msra.mxu0 0
      %689 = vmatprep.subr.bf16.mxu0 0
      %690 = vmatpush1.bf16.msra.mxu0 0
      %691 = vmatprep.subr.bf16.mxu0 0
      %692 = vmatpush1.bf16.msra.mxu0 0
      %693 = vmatprep.subr.bf16.mxu0 0
      %694 = vmatpush1.bf16.msra.mxu0 0
      %695 = vmatprep.subr.bf16.mxu0 0
      %696 = vmatpush1.bf16.msra.mxu0 0
      %697 = vmatprep.subr.bf16.mxu0 0
      %698 = vmatpush1.bf16.msra.mxu0 0
      %699 = vmatprep.subr.bf16.mxu0 0
      %700 = vmatpush1.bf16.msra.mxu0 0
      %701 = vmatprep.subr.bf16.mxu0 0
      %702 = vmatpush1.bf16.msra.mxu0 0
      %703 = vmatprep.subr.bf16.mxu0 0
      %704 = vmatpush1.bf16.msra.mxu0 0
      %705 = vmatprep.subr.bf16.mxu0 0
      %706 = vmatpush1.bf16.msra.mxu0 0
      %707 = vmatprep.subr.bf16.mxu0 0
      %708 = vmatpush1.bf16.msra.mxu0 0
      %709 = vmatprep.subr.bf16.mxu0 0
      %710 = vmatpush1.bf16.msra.mxu0 0
      %711 = vmatprep.subr.bf16.mxu0 0
      %712 = vmatpush1.bf16.msra.mxu0 0
      %713 = vmatprep.mubr.bf16.mxu0 0
      %714 = vmatmul.mubr.bf16.gmra.mrb[0].mxu0 %v676
      %v715 = vpop.f32.mrb[0].mxu0
      %v716 = vadd.f32 0.0, %v715
      %v717 = vpop.f32.mrb[0].mxu0
      %v718 = vpop.f32.mrb[0].mxu0
      %v719 = vpop.f32.mrb[0].mxu0
      %720 = vdwg.mxu0
      %v721 = vrcp.pop %v671
      %v722 = vmul.f32 %v716, %v721
      %v723 = vpack.c.bf16 %v722, %v722
      %v725 = vunpack.c.l.b16 %v723
      %v726 = vpack.c.b16 %v725, %v725
      %727 = vrot.lane.b32.xlu0 %v726, 24
      %v728 = vpop.permute.xlu0 %727
      %vm730 = vcmask 257216
      %731 = vst.msk [vmem:[%s252] sm:$0xf] %vm730, %v728
      %p732 = scmp.lt.s32.totalorder %s18, 1
      %s733 = scalar_select %p732, %s18, 1
      %p734 = scmp.lt.s32.totalorder %s19, 0
      %s735 = scalar_select %p734, %s19, 0
      %s736 = sadd.s32 %s735, %s733
      %s737 = smul.addr %s736, 4
      %s738 = scalar_lea.vmem %s3, %s737
      // Predicated region
      $region33: #{clip_attention_forward.4} parent=31 // pred_check
        %p739 = pneg %p130
      $region34: #{clip_attention_forward.4} parent=31 // pred_check_branch
        %741 = sbr.rel (%p739) target = $region36
      $region35: #{clip_attention_forward.4} parent=31 // pred_region
        _
      $region36: #{clip_attention_forward.4} parent=31 // pred_fallthru
        _
    $region32: #{clip_attention_forward.4} parent=5 // pred_fallthru
      _
    %p742 = scmp.le.s32.totalorder 2, %s9
    // Predicated region
    $region37: #{clip_attention_forward.4} parent=5 // pred_check
      %p743 = pneg %p742
    $region38: #{clip_attention_forward.4} parent=5 // pred_check_branch
      %745 = sbr.rel (%p743) target = $region40
    $region39: #{clip_attention_forward.4} parent=5 // pred_region
      %s746 = ssub.s32 %s9, 2
      // Predicated region
      $region41: #{clip_attention_forward.4} parent=39 // pred_check
        %p747 = pneg %p136
      $region42: #{clip_attention_forward.4} parent=39 // pred_check_branch
        %749 = sbr.rel (%p747) target = $region44
      $region43: #{clip_attention_forward.4} parent=39 // pred_region
        %p750 = scmp.lt.s32.totalorder %s20, 1
        %s751 = scalar_select %p750, %s20, 1
        %p752 = scmp.lt.s32.totalorder %s21, 0
        %s753 = scalar_select %p752, %s21, 0
        %s754 = sadd.s32 %s753, %s751
        %s755 = smul.addr %s754, 4
        %s756 = scalar_lea.vmem %s3, %s755
      $region44: #{clip_attention_forward.4} parent=39 // pred_fallthru
        _
    $region40: #{clip_attention_forward.4} parent=5 // pred_fallthru
      _
  $region6: #{clip_attention_forward.4} parent=0 // loop_footer
    %s13 = sadd.s32 1, %s9
  $region7: #{clip_attention_forward.4} parent=0 // loop_footer_branch
    %8 = sbr.rel target = $region3
  $region8: #{clip_attention_forward.4} parent=0 // loop_exit
    _

</llo_original>
